<compile_context>
chip_gen: v5e
topology: v5e:2x2
jax: 0.10.0
libtpu: 0.0.40
codegen_flags: <defaults>
</compile_context>

<pallas_src>
import functools

import jax
import jax.numpy as jnp
from jax.experimental import pallas as pl
from jax.experimental.pallas import tpu as pltpu


# ---------------------------------------------------------------------------
# Exact GELU helper (erf-based, matching nn.GELU default), lowering-safe.
# ---------------------------------------------------------------------------
def _erf_f32(x):
    # Abramowitz & Stegun 7.1.26 rational approximation, max abs error ~1.5e-7.
    a1 = 0.254829592
    a2 = -0.284496736
    a3 = 1.421413741
    a4 = -1.453152027
    a5 = 1.061405429
    p = 0.3275911
    sgn = jnp.where(x >= 0.0, 1.0, -1.0)
    ax = jnp.abs(x)
    t = 1.0 / (1.0 + p * ax)
    poly = ((((a5 * t + a4) * t + a3) * t + a2) * t + a1) * t
    y = 1.0 - poly * jnp.exp(-ax * ax)
    return sgn * y


def _gelu_exact(x):
    # 0.5 * x * (1 + erf(x / sqrt(2)))  == torch.nn.GELU() (exact)
    inv_sqrt2 = 0.7071067811865476
    return 0.5 * x * (1.0 + _erf_f32(x * inv_sqrt2))


# ---------------------------------------------------------------------------
# Kernel 1: h = LayerNorm(x); qkv = h @ Wqkv_t      (row-tiled)
# ---------------------------------------------------------------------------
def ln_qkv_kernel(x_ref, lnw_ref, lnb_ref, wqkv_ref, qkv_ref, *, eps):
    x = x_ref[...].astype(jnp.float32)                       # (TN, C)
    mean = jnp.mean(x, axis=-1, keepdims=True)
    cent = x - mean
    var = jnp.mean(cent * cent, axis=-1, keepdims=True)
    h = cent * jax.lax.rsqrt(var + eps) * lnw_ref[...] + lnb_ref[...]
    qkv = jnp.dot(h.astype(wqkv_ref.dtype), wqkv_ref[...],
                  preferred_element_type=jnp.float32)        # (TN, 3C) f32 acc
    qkv_ref[...] = qkv.astype(qkv_ref.dtype)                 # store bf16


# ---------------------------------------------------------------------------
# Kernel 2: flash-style multi-head attention, online softmax.
#   grid = (B, q_tiles, kv_tiles); all heads processed together per step.
# ---------------------------------------------------------------------------
def flash_attn_kernel(q_ref, k_ref, v_ref, o_ref, m_sc, l_sc, acc_sc, *, scale):
    ki = pl.program_id(2)

    @pl.when(ki == 0)
    def _():
        m_sc[...] = jnp.full(m_sc.shape, -jnp.inf, m_sc.dtype)
        l_sc[...] = jnp.zeros(l_sc.shape, l_sc.dtype)
        acc_sc[...] = jnp.zeros(acc_sc.shape, acc_sc.dtype)

    # scores: contract on the last (hd) dim directly — no transposed k copy.
    s = jnp.einsum("hqd,hkd->hqk", q_ref[...], k_ref[...],
                   preferred_element_type=jnp.float32) * scale     # (H, TQ, TK) f32

    m_prev = m_sc[...]
    m_new = jnp.maximum(m_prev, jnp.max(s, axis=-1, keepdims=True))
    alpha = jnp.exp(m_prev - m_new)
    p = jnp.exp(s - m_new)
    l_sc[...] = alpha * l_sc[...] + jnp.sum(p, axis=-1, keepdims=True)
    acc_sc[...] = alpha * acc_sc[...] + jnp.einsum(
        "hqk,hkd->hqd", p.astype(v_ref.dtype), v_ref[...],
        preferred_element_type=jnp.float32)
    m_sc[...] = m_new

    @pl.when(ki == pl.num_programs(2) - 1)
    def _():
        inv_l = pl.reciprocal(l_sc[...], approx=True)               # EUP, not VALU divide
        o_ref[...] = (acc_sc[...] * inv_l).astype(o_ref.dtype)


# ---------------------------------------------------------------------------
# Kernel 3: x1 = x + attn @ Wproj_t + b;  out = x1 + Mlp(LN2(x1))   (row-tiled)
# ---------------------------------------------------------------------------
def proj_mlp_kernel(x_ref, attn_ref, wproj_ref, bproj_ref,
                    ln2w_ref, ln2b_ref, wfc1_ref, bfc1_ref,
                    wfc2_ref, bfc2_ref, o_ref, *, eps):
    x = x_ref[...].astype(jnp.float32)                              # (TN, C)
    a = jnp.dot(attn_ref[...], wproj_ref[...],
                preferred_element_type=jnp.float32) + bproj_ref[...]
    x1 = x + a                                                      # residual 1 (f32)

    mean = jnp.mean(x1, axis=-1, keepdims=True)
    cent = x1 - mean
    var = jnp.mean(cent * cent, axis=-1, keepdims=True)
    h2 = cent * jax.lax.rsqrt(var + eps) * ln2w_ref[...] + ln2b_ref[...]

    hmid = jnp.dot(h2.astype(wfc1_ref.dtype), wfc1_ref[...],
                   preferred_element_type=jnp.float32) + bfc1_ref[...]
    hmid = _gelu_exact(hmid)                                        # exact GELU == nn.GELU
    mlp = jnp.dot(hmid.astype(wfc2_ref.dtype), wfc2_ref[...],
                  preferred_element_type=jnp.float32) + bfc2_ref[...]

    o_ref[...] = (x1 + mlp).astype(o_ref.dtype)                     # residual 2


# ---------------------------------------------------------------------------
# Wrapper
# ---------------------------------------------------------------------------
_VMEM_LIMIT = 48 * 1024 * 1024


def _row_tile(n, target=256):
    """Largest divisor of n that is <= target and a multiple of 8 (or n itself)."""
    if n <= target:
        return n
    for t in range(target, 7, -1):
        if n % t == 0 and t % 8 == 0:
            return t
    return n


def block_forward(x, params, *, num_heads, eps=1e-5):
    B, N, C = x.shape
    hd = C // num_heads
    assert num_heads * hd == C
    H = params["fc1_w"].shape[0]
    cdt = jnp.bfloat16

    # One-time weight layout prep in the wrapper (XLA): pre-transpose to (in, out),
    # store bf16 so the MXU consumes weights directly (f32 accumulation in-kernel).
    wqkv_t = params["qkv_w"].T.astype(cdt)        # (C, 3C)
    wproj_t = params["proj_w"].T.astype(cdt)      # (C, C)
    wfc1_t = params["fc1_w"].T.astype(cdt)        # (C, H)
    wfc2_t = params["fc2_w"].T.astype(cdt)        # (H, C)
    ln1_w = params["ln1_w"].reshape(1, C).astype(jnp.float32)
    ln1_b = params["ln1_b"].reshape(1, C).astype(jnp.float32)
    ln2_w = params["ln2_w"].reshape(1, C).astype(jnp.float32)
    ln2_b = params["ln2_b"].reshape(1, C).astype(jnp.float32)
    proj_b = params["proj_b"].reshape(1, C).astype(jnp.float32)
    fc1_b = params["fc1_b"].reshape(1, H).astype(jnp.float32)
    fc2_b = params["fc2_b"].reshape(1, C).astype(jnp.float32)

    tn = _row_tile(N)
    nt = N // tn
    assert nt * tn == N

    def const2d(shape):
        return pl.BlockSpec(shape, lambda b, t: (0, 0))

    # ---- Kernel 1: LN1 + QKV projection -------------------------------------
    qkv = pl.pallas_call(
        functools.partial(ln_qkv_kernel, eps=eps),
        out_shape=jax.ShapeDtypeStruct((B, N, 3 * C), cdt),
        grid=(B, nt),
        in_specs=[
            pl.BlockSpec((None, tn, C), lambda b, t: (b, t, 0)),   # x tile
            const2d((1, C)), const2d((1, C)),                      # ln1 w, b
            const2d((C, 3 * C)),                                   # Wqkv (pre-transposed)
        ],
        out_specs=pl.BlockSpec((None, tn, 3 * C), lambda b, t: (b, t, 0)),
        compiler_params=pltpu.CompilerParams(
            dimension_semantics=("parallel", "parallel"),
            vmem_limit_bytes=_VMEM_LIMIT),
    )(x, ln1_w, ln1_b, wqkv_t)

    # Wrapper-side layout plumbing (XLA): split heads for the attention kernel.
    qkv = qkv.reshape(B, N, 3, num_heads, hd)
    q = jnp.transpose(qkv[:, :, 0], (0, 2, 1, 3))   # (B, heads, N, hd) bf16
    k = jnp.transpose(qkv[:, :, 1], (0, 2, 1, 3))
    v = jnp.transpose(qkv[:, :, 2], (0, 2, 1, 3))

    tq = tk = tn
    nq = N // tq
    nk = N // tk
    scale = float(hd) ** -0.5

    # ---- Kernel 2: flash attention -------------------------------------------
    attn_h = pl.pallas_call(
        functools.partial(flash_attn_kernel, scale=scale),
        out_shape=jax.ShapeDtypeStruct((B, num_heads, N, hd), cdt),
        grid=(B, nq, nk),
        in_specs=[
            pl.BlockSpec((None, num_heads, tq, hd), lambda b, qi, ki: (b, 0, qi, 0)),
            pl.BlockSpec((None, num_heads, tk, hd), lambda b, qi, ki: (b, 0, ki, 0)),
            pl.BlockSpec((None, num_heads, tk, hd), lambda b, qi, ki: (b, 0, ki, 0)),
        ],
        out_specs=pl.BlockSpec((None, num_heads, tq, hd),
                               lambda b, qi, ki: (b, 0, qi, 0)),
        scratch_shapes=[
            pltpu.VMEM((num_heads, tq, 1), jnp.float32),    # running max
            pltpu.VMEM((num_heads, tq, 1), jnp.float32),    # running sum
            pltpu.VMEM((num_heads, tq, hd), jnp.float32),   # accumulator
        ],
        compiler_params=pltpu.CompilerParams(
            dimension_semantics=("parallel", "parallel", "arbitrary"),
            vmem_limit_bytes=_VMEM_LIMIT),
    )(q, k, v)

    # merge heads back: (B, heads, N, hd) -> (B, N, C)   (wrapper-side plumbing)
    attn = jnp.transpose(attn_h, (0, 2, 1, 3)).reshape(B, N, C)

    # ---- Kernel 3: proj + residual + LN2 + MLP + residual ---------------------
    out = pl.pallas_call(
        functools.partial(proj_mlp_kernel, eps=eps),
        out_shape=jax.ShapeDtypeStruct((B, N, C), x.dtype),
        grid=(B, nt),
        in_specs=[
            pl.BlockSpec((None, tn, C), lambda b, t: (b, t, 0)),   # x tile (residual)
            pl.BlockSpec((None, tn, C), lambda b, t: (b, t, 0)),   # attention output tile
            const2d((C, C)), const2d((1, C)),                      # proj w, b
            const2d((1, C)), const2d((1, C)),                      # ln2 w, b
            const2d((C, H)), const2d((1, H)),                      # fc1 w, b
            const2d((H, C)), const2d((1, C)),                      # fc2 w, b
        ],
        out_specs=pl.BlockSpec((None, tn, C), lambda b, t: (b, t, 0)),
        compiler_params=pltpu.CompilerParams(
            dimension_semantics=("parallel", "parallel"),
            vmem_limit_bytes=_VMEM_LIMIT),
    )(x, attn, wproj_t, proj_b, ln2_w, ln2_b, wfc1_t, fc1_b, wfc2_t, fc2_b)
    # TODO(synk): on v7x, single-buffer the constant weight blocks to halve weight VMEM;
    # default double-buffering kept here for portability.
    return out


# ---------------------------------------------------------------------------
# Pure-JAX f32 reference of Block.forward (gamma=None, eval mode)
# ---------------------------------------------------------------------------
def reference_forward(x, params, *, num_heads, eps=1e-5):
    def ln(v, w, b):
        m = jnp.mean(v, -1, keepdims=True)
        c = v - m
        var = jnp.mean(c * c, -1, keepdims=True)
        return c / jnp.sqrt(var + eps) * w + b

    B, N, C = x.shape
    hd = C // num_heads
    h1 = ln(x, params["ln1_w"], params["ln1_b"])
    qkv = h1 @ params["qkv_w"].T
    qkv = qkv.reshape(B, N, 3, num_heads, hd).transpose(2, 0, 3, 1, 4)
    q, k, v = qkv[0], qkv[1], qkv[2]
    s = jnp.einsum("bhqd,bhkd->bhqk", q, k) / (hd ** 0.5)
    p = jax.nn.softmax(s, axis=-1)
    a = jnp.einsum("bhqk,bhkd->bhqd", p, v)
    a = a.transpose(0, 2, 1, 3).reshape(B, N, C)
    a = a @ params["proj_w"].T + params["proj_b"]
    x1 = x + a
    h2 = ln(x1, params["ln2_w"], params["ln2_b"])
    m = jax.nn.gelu(h2 @ params["fc1_w"].T + params["fc1_b"], approximate=False)
    m = m @ params["fc2_w"].T + params["fc2_b"]
    return x1 + m


if __name__ == "__main__":
    B, N, C = 2, 8, 32
    num_heads = 4
    mlp_ratio = 4.0
    H = int(C * mlp_ratio)

    key = jax.random.PRNGKey(0)
    keys = jax.random.split(key, 8)

    params = {
        "ln1_w": jnp.ones((C,), jnp.float32),
        "ln1_b": jnp.zeros((C,), jnp.float32),
        "qkv_w": 0.02 * jax.random.normal(keys[0], (3 * C, C), jnp.float32),
        "proj_w": 0.02 * jax.random.normal(keys[1], (C, C), jnp.float32),
        "proj_b": 0.01 * jax.random.normal(keys[2], (C,), jnp.float32),
        "ln2_w": jnp.ones((C,), jnp.float32),
        "ln2_b": jnp.zeros((C,), jnp.float32),
        "fc1_w": 0.02 * jax.random.normal(keys[3], (H, C), jnp.float32),
        "fc1_b": 0.01 * jax.random.normal(keys[4], (H,), jnp.float32),
        "fc2_w": 0.02 * jax.random.normal(keys[5], (C, H), jnp.float32),
        "fc2_b": 0.01 * jax.random.normal(keys[6], (C,), jnp.float32),
    }

    x = jax.random.normal(keys[7], (B, N, C), jnp.float32)

    fwd = jax.jit(functools.partial(block_forward, num_heads=num_heads))
    out = jax.block_until_ready(fwd(x, params))

    ref = reference_forward(x, params, num_heads=num_heads)
    assert out.shape == (B, N, C)
    # bf16 MXU operands (f32 accumulation) -> compare against the f32 reference with a
    # bf16-appropriate tolerance.
    assert jnp.allclose(out, ref, atol=2e-2, rtol=2e-2), (
        f"mismatch vs pure-JAX reference: max abs diff {jnp.max(jnp.abs(out - ref))}")

    print("KERNEL_OK")
</pallas_src>

<mosaic_0001>
module attributes {stable_mosaic.version = 11 : i64} {
  func.func @ln_qkv_kernel(%arg0: i32, %arg1: i32, %arg2: memref<1x8x32xf32, #tpu.memory_space<vmem>>, %arg3: memref<1x32xf32, #tpu.memory_space<vmem>>, %arg4: memref<1x32xf32, #tpu.memory_space<vmem>>, %arg5: memref<32x96xbf16, #tpu.memory_space<vmem>>, %arg6: memref<1x8x96xbf16, #tpu.memory_space<vmem>>) attributes {dimension_semantics = [#tpu.dimension_semantics<parallel>, #tpu.dimension_semantics<parallel>], iteration_bounds = array<i64: 2, 1>, scalar_prefetch = 0 : i64, scratch_operands = 0 : i64, tpu.core_type = #tpu.core_type<tc>, window_params = [{transform_indices = @transform_0, window_bounds = array<i64: 1, 8, 32>}, {pipeline_mode = #tpu.pipeline_mode<synchronous>, transform_indices = @transform_1, window_bounds = array<i64: 1, 32>}, {pipeline_mode = #tpu.pipeline_mode<synchronous>, transform_indices = @transform_2, window_bounds = array<i64: 1, 32>}, {pipeline_mode = #tpu.pipeline_mode<synchronous>, transform_indices = @transform_3, window_bounds = array<i64: 32, 96>}, {transform_indices = @transform_4, window_bounds = array<i64: 1, 8, 96>}]} {
    %c0 = arith.constant 0 : index
    %c0_0 = arith.constant 0 : index
    %c0_1 = arith.constant 0 : index
    %0 = vector.load %arg2[%c0, %c0_0, %c0_1] : memref<1x8x32xf32, #tpu.memory_space<vmem>>, vector<1x8x32xf32>
    %1 = vector.shape_cast %0 : vector<1x8x32xf32> to vector<8x32xf32>
    %cst = arith.constant dense<0.000000e+00> : vector<8xf32>
    %2 = vector.multi_reduction <add>, %1, %cst [1] : vector<8x32xf32> to vector<8xf32>
    %3 = vector.shape_cast %2 : vector<8xf32> to vector<8x1xf32>
    %cst_2 = arith.constant 3.200000e+01 : f32
    %4 = vector.broadcast %cst_2 : f32 to vector<8x1xf32>
    %5 = arith.divf %3, %4 : vector<8x1xf32>
    %6 = vector.broadcast %5 : vector<8x1xf32> to vector<8x32xf32>
    %7 = arith.subf %1, %6 : vector<8x32xf32>
    %8 = arith.mulf %7, %7 : vector<8x32xf32>
    %cst_3 = arith.constant dense<0.000000e+00> : vector<8xf32>
    %9 = vector.multi_reduction <add>, %8, %cst_3 [1] : vector<8x32xf32> to vector<8xf32>
    %10 = vector.shape_cast %9 : vector<8xf32> to vector<8x1xf32>
    %cst_4 = arith.constant 3.200000e+01 : f32
    %11 = vector.broadcast %cst_4 : f32 to vector<8x1xf32>
    %12 = arith.divf %10, %11 : vector<8x1xf32>
    %cst_5 = arith.constant 9.99999974E-6 : f32
    %13 = vector.broadcast %cst_5 : f32 to vector<8x1xf32>
    %14 = arith.addf %12, %13 : vector<8x1xf32>
    %15 = math.rsqrt %14 : vector<8x1xf32>
    %16 = vector.broadcast %15 : vector<8x1xf32> to vector<8x32xf32>
    %17 = arith.mulf %7, %16 : vector<8x32xf32>
    %c0_6 = arith.constant 0 : index
    %c0_7 = arith.constant 0 : index
    %18 = vector.load %arg3[%c0_6, %c0_7] : memref<1x32xf32, #tpu.memory_space<vmem>>, vector<1x32xf32>
    %19 = vector.broadcast %18 : vector<1x32xf32> to vector<8x32xf32>
    %20 = arith.mulf %17, %19 : vector<8x32xf32>
    %c0_8 = arith.constant 0 : index
    %c0_9 = arith.constant 0 : index
    %21 = vector.load %arg4[%c0_8, %c0_9] : memref<1x32xf32, #tpu.memory_space<vmem>>, vector<1x32xf32>
    %22 = vector.broadcast %21 : vector<1x32xf32> to vector<8x32xf32>
    %23 = arith.addf %20, %22 : vector<8x32xf32>
    %24 = arith.truncf %23 : vector<8x32xf32> to vector<8x32xbf16>
    %c0_10 = arith.constant 0 : index
    %c0_11 = arith.constant 0 : index
    %25 = vector.load %arg5[%c0_10, %c0_11] : memref<32x96xbf16, #tpu.memory_space<vmem>>, vector<32x96xbf16>
    %cst_12 = arith.constant dense<0.000000e+00> : vector<8x96xf32>
    %26 = tpu.matmul %24, %25, %cst_12 {dimension_numbers = #tpu.dot_dimension_numbers<[1], [0], [0], [1], [0, 0, 1, 1], [], []>} : vector<8x32xbf16>, vector<32x96xbf16>, vector<8x96xf32> -> vector<8x96xf32>
    %27 = arith.truncf %26 : vector<8x96xf32> to vector<8x96xbf16>
    %c0_13 = arith.constant 0 : index
    %c0_14 = arith.constant 0 : index
    %c0_15 = arith.constant 0 : index
    %28 = vector.load %arg6[%c0_13, %c0_14, %c0_15] : memref<1x8x96xbf16, #tpu.memory_space<vmem>>, vector<1x8x96xbf16>
    %29 = vector.shape_cast %28 : vector<1x8x96xbf16> to vector<8x96xbf16>
    %30 = vector.shape_cast %27 : vector<8x96xbf16> to vector<1x8x96xbf16>
    tpu.vector_store %arg6[%c0_13, %c0_14, %c0_15], %30 {strides = array<i32>} : memref<1x8x96xbf16, #tpu.memory_space<vmem>>, vector<1x8x96xbf16>,
    return
  }
  func.func @transform_0(%arg0: i32, %arg1: i32) -> (i32, i32, i32) {
    %c0_i32 = arith.constant 0 : i32
    %c0_i32_0 = arith.constant 0 : i32
    return %arg0, %arg1, %c0_i32 : i32, i32, i32
  }
  func.func @transform_1(%arg0: i32, %arg1: i32) -> (i32, i32) {
    %c0_i32 = arith.constant 0 : i32
    %c0_i32_0 = arith.constant 0 : i32
    %c0_i32_1 = arith.constant 0 : i32
    return %c0_i32, %c0_i32_0 : i32, i32
  }
  func.func @transform_2(%arg0: i32, %arg1: i32) -> (i32, i32) {
    %c0_i32 = arith.constant 0 : i32
    %c0_i32_0 = arith.constant 0 : i32
    %c0_i32_1 = arith.constant 0 : i32
    return %c0_i32, %c0_i32_0 : i32, i32
  }
  func.func @transform_3(%arg0: i32, %arg1: i32) -> (i32, i32) {
    %c0_i32 = arith.constant 0 : i32
    %c0_i32_0 = arith.constant 0 : i32
    %c0_i32_1 = arith.constant 0 : i32
    return %c0_i32, %c0_i32_0 : i32, i32
  }
  func.func @transform_4(%arg0: i32, %arg1: i32) -> (i32, i32, i32) {
    %c0_i32 = arith.constant 0 : i32
    %c0_i32_0 = arith.constant 0 : i32
    return %arg0, %arg1, %c0_i32 : i32, i32, i32
  }
}

module attributes {stable_mosaic.version = 11 : i64} {
  func.func @flash_attn_kernel(%arg0: i32, %arg1: i32, %arg2: i32, %arg3: memref<1x4x8x8xbf16, #tpu.memory_space<vmem>>, %arg4: memref<1x4x8x8xbf16, #tpu.memory_space<vmem>>, %arg5: memref<1x4x8x8xbf16, #tpu.memory_space<vmem>>, %arg6: memref<1x4x8x8xbf16, #tpu.memory_space<vmem>>, %arg7: memref<4x8x1xf32, #tpu.memory_space<vmem>>, %arg8: memref<4x8x1xf32, #tpu.memory_space<vmem>>, %arg9: memref<4x8x8xf32, #tpu.memory_space<vmem>>) attributes {dimension_semantics = [#tpu.dimension_semantics<parallel>, #tpu.dimension_semantics<parallel>, #tpu.dimension_semantics<arbitrary>], iteration_bounds = array<i64: 2, 1, 1>, scalar_prefetch = 0 : i64, scratch_operands = 3 : i64, tpu.core_type = #tpu.core_type<tc>, window_params = [{transform_indices = @transform_0, window_bounds = array<i64: 1, 4, 8, 8>}, {transform_indices = @transform_1, window_bounds = array<i64: 1, 4, 8, 8>}, {transform_indices = @transform_2, window_bounds = array<i64: 1, 4, 8, 8>}, {transform_indices = @transform_3, window_bounds = array<i64: 1, 4, 8, 8>}]} {
    %c0_i32 = arith.constant 0 : i32
    %0 = arith.cmpi eq, %arg2, %c0_i32 : i32
    %1 = arith.extui %0 : i1 to i32
    %c0_i32_0 = arith.constant 0 : i32
    %2 = arith.cmpi ne, %1, %c0_i32_0 : i32
    scf.if %2 {
      %cst_36 = arith.constant 0xFF800000 : f32
      %38 = vector.broadcast %cst_36 : f32 to vector<4x8x1xf32>
      %c0_37 = arith.constant 0 : index
      %c0_38 = arith.constant 0 : index
      %c0_39 = arith.constant 0 : index
      %39 = vector.load %arg7[%c0_37, %c0_38, %c0_39] : memref<4x8x1xf32, #tpu.memory_space<vmem>>, vector<4x8x1xf32>
      tpu.vector_store %arg7[%c0_37, %c0_38, %c0_39], %38 {strides = array<i32>} : memref<4x8x1xf32, #tpu.memory_space<vmem>>, vector<4x8x1xf32>,
      %cst_40 = arith.constant 0.000000e+00 : f32
      %40 = vector.broadcast %cst_40 : f32 to vector<4x8x1xf32>
      %c0_41 = arith.constant 0 : index
      %c0_42 = arith.constant 0 : index
      %c0_43 = arith.constant 0 : index
      %41 = vector.load %arg8[%c0_41, %c0_42, %c0_43] : memref<4x8x1xf32, #tpu.memory_space<vmem>>, vector<4x8x1xf32>
      tpu.vector_store %arg8[%c0_41, %c0_42, %c0_43], %40 {strides = array<i32>} : memref<4x8x1xf32, #tpu.memory_space<vmem>>, vector<4x8x1xf32>,
      %cst_44 = arith.constant 0.000000e+00 : f32
      %42 = vector.broadcast %cst_44 : f32 to vector<4x8x8xf32>
      %c0_45 = arith.constant 0 : index
      %c0_46 = arith.constant 0 : index
      %c0_47 = arith.constant 0 : index
      %43 = vector.load %arg9[%c0_45, %c0_46, %c0_47] : memref<4x8x8xf32, #tpu.memory_space<vmem>>, vector<4x8x8xf32>
      tpu.vector_store %arg9[%c0_45, %c0_46, %c0_47], %42 {strides = array<i32>} : memref<4x8x8xf32, #tpu.memory_space<vmem>>, vector<4x8x8xf32>,
    } else {
    }
    %c0 = arith.constant 0 : index
    %c0_1 = arith.constant 0 : index
    %c0_2 = arith.constant 0 : index
    %c0_3 = arith.constant 0 : index
    %3 = vector.load %arg3[%c0, %c0_1, %c0_2, %c0_3] : memref<1x4x8x8xbf16, #tpu.memory_space<vmem>>, vector<1x4x8x8xbf16>
    %4 = vector.shape_cast %3 : vector<1x4x8x8xbf16> to vector<4x8x8xbf16>
    %c0_4 = arith.constant 0 : index
    %c0_5 = arith.constant 0 : index
    %c0_6 = arith.constant 0 : index
    %c0_7 = arith.constant 0 : index
    %5 = vector.load %arg4[%c0_4, %c0_5, %c0_6, %c0_7] : memref<1x4x8x8xbf16, #tpu.memory_space<vmem>>, vector<1x4x8x8xbf16>
    %6 = vector.shape_cast %5 : vector<1x4x8x8xbf16> to vector<4x8x8xbf16>
    "tpu.trace_start"() <{level = 10 : i32, message = "hqd,hkd->hqk"}> : () -> ()
    %cst = arith.constant dense<0.000000e+00> : vector<4x8x8xf32>
    %7 = tpu.matmul %4, %6, %cst {dimension_numbers = #tpu.dot_dimension_numbers<[2], [2], [1], [1], [0, 0, 0, 1, 1, 1], [0], [0]>} : vector<4x8x8xbf16>, vector<4x8x8xbf16>, vector<4x8x8xf32> -> vector<4x8x8xf32>
    "tpu.trace_stop"() : () -> ()
    %cst_8 = arith.constant 0.353553385 : f32
    %8 = vector.broadcast %cst_8 : f32 to vector<4x8x8xf32>
    %9 = arith.mulf %7, %8 : vector<4x8x8xf32>
    %c0_9 = arith.constant 0 : index
    %c0_10 = arith.constant 0 : index
    %c0_11 = arith.constant 0 : index
    %10 = vector.load %arg7[%c0_9, %c0_10, %c0_11] : memref<4x8x1xf32, #tpu.memory_space<vmem>>, vector<4x8x1xf32>
    %cst_12 = arith.constant dense<0xFF800000> : vector<4x8xf32>
    %11 = vector.multi_reduction <maximumf>, %9, %cst_12 [2] : vector<4x8x8xf32> to vector<4x8xf32>
    %12 = vector.shape_cast %11 : vector<4x8xf32> to vector<4x8x1xf32>
    %13 = arith.maximumf %10, %12 : vector<4x8x1xf32>
    %14 = arith.subf %10, %13 : vector<4x8x1xf32>
    %15 = math.exp %14 : vector<4x8x1xf32>
    %16 = vector.broadcast %13 : vector<4x8x1xf32> to vector<4x8x8xf32>
    %17 = arith.subf %9, %16 : vector<4x8x8xf32>
    %18 = math.exp %17 : vector<4x8x8xf32>
    %c0_13 = arith.constant 0 : index
    %c0_14 = arith.constant 0 : index
    %c0_15 = arith.constant 0 : index
    %19 = vector.load %arg8[%c0_13, %c0_14, %c0_15] : memref<4x8x1xf32, #tpu.memory_space<vmem>>, vector<4x8x1xf32>
    %20 = arith.mulf %15, %19 : vector<4x8x1xf32>
    %cst_16 = arith.constant dense<0.000000e+00> : vector<4x8xf32>
    %21 = vector.multi_reduction <add>, %18, %cst_16 [2] : vector<4x8x8xf32> to vector<4x8xf32>
    %22 = vector.shape_cast %21 : vector<4x8xf32> to vector<4x8x1xf32>
    %23 = arith.addf %20, %22 : vector<4x8x1xf32>
    %c0_17 = arith.constant 0 : index
    %c0_18 = arith.constant 0 : index
    %c0_19 = arith.constant 0 : index
    %24 = vector.load %arg8[%c0_17, %c0_18, %c0_19] : memref<4x8x1xf32, #tpu.memory_space<vmem>>, vector<4x8x1xf32>
    tpu.vector_store %arg8[%c0_17, %c0_18, %c0_19], %23 {strides = array<i32>} : memref<4x8x1xf32, #tpu.memory_space<vmem>>, vector<4x8x1xf32>,
    %c0_20 = arith.constant 0 : index
    %c0_21 = arith.constant 0 : index
    %c0_22 = arith.constant 0 : index
    %25 = vector.load %arg9[%c0_20, %c0_21, %c0_22] : memref<4x8x8xf32, #tpu.memory_space<vmem>>, vector<4x8x8xf32>
    %26 = vector.broadcast %15 : vector<4x8x1xf32> to vector<4x8x8xf32>
    %27 = arith.mulf %26, %25 : vector<4x8x8xf32>
    %28 = arith.truncf %18 : vector<4x8x8xf32> to vector<4x8x8xbf16>
    %c0_23 = arith.constant 0 : index
    %c0_24 = arith.constant 0 : index
    %c0_25 = arith.constant 0 : index
    %c0_26 = arith.constant 0 : index
    %29 = vector.load %arg5[%c0_23, %c0_24, %c0_25, %c0_26] : memref<1x4x8x8xbf16, #tpu.memory_space<vmem>>, vector<1x4x8x8xbf16>
    %30 = vector.shape_cast %29 : vector<1x4x8x8xbf16> to vector<4x8x8xbf16>
    "tpu.trace_start"() <{level = 10 : i32, message = "hqk,hkd->hqd"}> : () -> ()
    %cst_27 = arith.constant dense<0.000000e+00> : vector<4x8x8xf32>
    %31 = tpu.matmul %28, %30, %cst_27 {dimension_numbers = #tpu.dot_dimension_numbers<[2], [1], [1], [2], [0, 0, 0, 1, 1, 2], [0], [0]>} : vector<4x8x8xbf16>, vector<4x8x8xbf16>, vector<4x8x8xf32> -> vector<4x8x8xf32>
    "tpu.trace_stop"() : () -> ()
    %32 = arith.addf %27, %31 : vector<4x8x8xf32>
    %c0_28 = arith.constant 0 : index
    %c0_29 = arith.constant 0 : index
    %c0_30 = arith.constant 0 : index
    %33 = vector.load %arg9[%c0_28, %c0_29, %c0_30] : memref<4x8x8xf32, #tpu.memory_space<vmem>>, vector<4x8x8xf32>
    tpu.vector_store %arg9[%c0_28, %c0_29, %c0_30], %32 {strides = array<i32>} : memref<4x8x8xf32, #tpu.memory_space<vmem>>, vector<4x8x8xf32>,
    %c0_31 = arith.constant 0 : index
    %c0_32 = arith.constant 0 : index
    %c0_33 = arith.constant 0 : index
    %34 = vector.load %arg7[%c0_31, %c0_32, %c0_33] : memref<4x8x1xf32, #tpu.memory_space<vmem>>, vector<4x8x1xf32>
    tpu.vector_store %arg7[%c0_31, %c0_32, %c0_33], %13 {strides = array<i32>} : memref<4x8x1xf32, #tpu.memory_space<vmem>>, vector<4x8x1xf32>,
    %c0_i32_34 = arith.constant 0 : i32
    %35 = arith.cmpi eq, %arg2, %c0_i32_34 : i32
    %36 = arith.extui %35 : i1 to i32
    %c0_i32_35 = arith.constant 0 : i32
    %37 = arith.cmpi ne, %36, %c0_i32_35 : i32
    scf.if %37 {
      %c0_36 = arith.constant 0 : index
      %c0_37 = arith.constant 0 : index
      %c0_38 = arith.constant 0 : index
      %38 = vector.load %arg8[%c0_36, %c0_37, %c0_38] : memref<4x8x1xf32, #tpu.memory_space<vmem>>, vector<4x8x1xf32>
      %39 = tpu.reciprocal %38 {approx = true} : vector<4x8x1xf32> -> vector<4x8x1xf32>
      %c0_39 = arith.constant 0 : index
      %c0_40 = arith.constant 0 : index
      %c0_41 = arith.constant 0 : index
      %40 = vector.load %arg9[%c0_39, %c0_40, %c0_41] : memref<4x8x8xf32, #tpu.memory_space<vmem>>, vector<4x8x8xf32>
      %41 = vector.broadcast %39 : vector<4x8x1xf32> to vector<4x8x8xf32>
      %42 = arith.mulf %40, %41 : vector<4x8x8xf32>
      %43 = arith.truncf %42 : vector<4x8x8xf32> to vector<4x8x8xbf16>
      %c0_42 = arith.constant 0 : index
      %c0_43 = arith.constant 0 : index
      %c0_44 = arith.constant 0 : index
      %c0_45 = arith.constant 0 : index
      %44 = vector.load %arg6[%c0_42, %c0_43, %c0_44, %c0_45] : memref<1x4x8x8xbf16, #tpu.memory_space<vmem>>, vector<1x4x8x8xbf16>
      %45 = vector.shape_cast %44 : vector<1x4x8x8xbf16> to vector<4x8x8xbf16>
      %46 = vector.shape_cast %43 : vector<4x8x8xbf16> to vector<1x4x8x8xbf16>
      tpu.vector_store %arg6[%c0_42, %c0_43, %c0_44, %c0_45], %46 {strides = array<i32>} : memref<1x4x8x8xbf16, #tpu.memory_space<vmem>>, vector<1x4x8x8xbf16>,
    } else {
    }
    return
  }
  func.func @transform_0(%arg0: i32, %arg1: i32, %arg2: i32) -> (i32, i32, i32, i32) {
    %c0_i32 = arith.constant 0 : i32
    %c0_i32_0 = arith.constant 0 : i32
    %c0_i32_1 = arith.constant 0 : i32
    return %arg0, %c0_i32, %arg1, %c0_i32_0 : i32, i32, i32, i32
  }
  func.func @transform_1(%arg0: i32, %arg1: i32, %arg2: i32) -> (i32, i32, i32, i32) {
    %c0_i32 = arith.constant 0 : i32
    %c0_i32_0 = arith.constant 0 : i32
    %c0_i32_1 = arith.constant 0 : i32
    return %arg0, %c0_i32, %arg2, %c0_i32_0 : i32, i32, i32, i32
  }
  func.func @transform_2(%arg0: i32, %arg1: i32, %arg2: i32) -> (i32, i32, i32, i32) {
    %c0_i32 = arith.constant 0 : i32
    %c0_i32_0 = arith.constant 0 : i32
    %c0_i32_1 = arith.constant 0 : i32
    return %arg0, %c0_i32, %arg2, %c0_i32_0 : i32, i32, i32, i32
  }
  func.func @transform_3(%arg0: i32, %arg1: i32, %arg2: i32) -> (i32, i32, i32, i32) {
    %c0_i32 = arith.constant 0 : i32
    %c0_i32_0 = arith.constant 0 : i32
    %c0_i32_1 = arith.constant 0 : i32
    return %arg0, %c0_i32, %arg1, %c0_i32_0 : i32, i32, i32, i32
  }
}

module attributes {stable_mosaic.version = 11 : i64} {
  func.func @proj_mlp_kernel(%arg0: i32, %arg1: i32, %arg2: memref<1x8x32xf32, #tpu.memory_space<vmem>>, %arg3: memref<1x8x32xbf16, #tpu.memory_space<vmem>>, %arg4: memref<32x32xbf16, #tpu.memory_space<vmem>>, %arg5: memref<1x32xf32, #tpu.memory_space<vmem>>, %arg6: memref<1x32xf32, #tpu.memory_space<vmem>>, %arg7: memref<1x32xf32, #tpu.memory_space<vmem>>, %arg8: memref<32x128xbf16, #tpu.memory_space<vmem>>, %arg9: memref<1x128xf32, #tpu.memory_space<vmem>>, %arg10: memref<128x32xbf16, #tpu.memory_space<vmem>>, %arg11: memref<1x32xf32, #tpu.memory_space<vmem>>, %arg12: memref<1x8x32xf32, #tpu.memory_space<vmem>>) attributes {dimension_semantics = [#tpu.dimension_semantics<parallel>, #tpu.dimension_semantics<parallel>], iteration_bounds = array<i64: 2, 1>, scalar_prefetch = 0 : i64, scratch_operands = 0 : i64, tpu.core_type = #tpu.core_type<tc>, window_params = [{transform_indices = @transform_0, window_bounds = array<i64: 1, 8, 32>}, {transform_indices = @transform_1, window_bounds = array<i64: 1, 8, 32>}, {pipeline_mode = #tpu.pipeline_mode<synchronous>, transform_indices = @transform_2, window_bounds = array<i64: 32, 32>}, {pipeline_mode = #tpu.pipeline_mode<synchronous>, transform_indices = @transform_3, window_bounds = array<i64: 1, 32>}, {pipeline_mode = #tpu.pipeline_mode<synchronous>, transform_indices = @transform_4, window_bounds = array<i64: 1, 32>}, {pipeline_mode = #tpu.pipeline_mode<synchronous>, transform_indices = @transform_5, window_bounds = array<i64: 1, 32>}, {pipeline_mode = #tpu.pipeline_mode<synchronous>, transform_indices = @transform_6, window_bounds = array<i64: 32, 128>}, {pipeline_mode = #tpu.pipeline_mode<synchronous>, transform_indices = @transform_7, window_bounds = array<i64: 1, 128>}, {pipeline_mode = #tpu.pipeline_mode<synchronous>, transform_indices = @transform_8, window_bounds = array<i64: 128, 32>}, {pipeline_mode = #tpu.pipeline_mode<synchronous>, transform_indices = @transform_9, window_bounds = array<i64: 1, 32>}, {transform_indices = @transform_10, window_bounds = array<i64: 1, 8, 32>}]} {
    %c0 = arith.constant 0 : index
    %c0_0 = arith.constant 0 : index
    %c0_1 = arith.constant 0 : index
    %0 = vector.load %arg2[%c0, %c0_0, %c0_1] : memref<1x8x32xf32, #tpu.memory_space<vmem>>, vector<1x8x32xf32>
    %1 = vector.shape_cast %0 : vector<1x8x32xf32> to vector<8x32xf32>
    %c0_2 = arith.constant 0 : index
    %c0_3 = arith.constant 0 : index
    %c0_4 = arith.constant 0 : index
    %2 = vector.load %arg3[%c0_2, %c0_3, %c0_4] : memref<1x8x32xbf16, #tpu.memory_space<vmem>>, vector<1x8x32xbf16>
    %3 = vector.shape_cast %2 : vector<1x8x32xbf16> to vector<8x32xbf16>
    %c0_5 = arith.constant 0 : index
    %c0_6 = arith.constant 0 : index
    %4 = vector.load %arg4[%c0_5, %c0_6] : memref<32x32xbf16, #tpu.memory_space<vmem>>, vector<32x32xbf16>
    %cst = arith.constant dense<0.000000e+00> : vector<8x32xf32>
    %5 = tpu.matmul %3, %4, %cst {dimension_numbers = #tpu.dot_dimension_numbers<[1], [0], [0], [1], [0, 0, 1, 1], [], []>} : vector<8x32xbf16>, vector<32x32xbf16>, vector<8x32xf32> -> vector<8x32xf32>
    %c0_7 = arith.constant 0 : index
    %c0_8 = arith.constant 0 : index
    %6 = vector.load %arg5[%c0_7, %c0_8] : memref<1x32xf32, #tpu.memory_space<vmem>>, vector<1x32xf32>
    %7 = vector.broadcast %6 : vector<1x32xf32> to vector<8x32xf32>
    %8 = arith.addf %5, %7 : vector<8x32xf32>
    %9 = arith.addf %1, %8 : vector<8x32xf32>
    %cst_9 = arith.constant dense<0.000000e+00> : vector<8xf32>
    %10 = vector.multi_reduction <add>, %9, %cst_9 [1] : vector<8x32xf32> to vector<8xf32>
    %11 = vector.shape_cast %10 : vector<8xf32> to vector<8x1xf32>
    %cst_10 = arith.constant 3.200000e+01 : f32
    %12 = vector.broadcast %cst_10 : f32 to vector<8x1xf32>
    %13 = arith.divf %11, %12 : vector<8x1xf32>
    %14 = vector.broadcast %13 : vector<8x1xf32> to vector<8x32xf32>
    %15 = arith.subf %9, %14 : vector<8x32xf32>
    %16 = arith.mulf %15, %15 : vector<8x32xf32>
    %cst_11 = arith.constant dense<0.000000e+00> : vector<8xf32>
    %17 = vector.multi_reduction <add>, %16, %cst_11 [1] : vector<8x32xf32> to vector<8xf32>
    %18 = vector.shape_cast %17 : vector<8xf32> to vector<8x1xf32>
    %cst_12 = arith.constant 3.200000e+01 : f32
    %19 = vector.broadcast %cst_12 : f32 to vector<8x1xf32>
    %20 = arith.divf %18, %19 : vector<8x1xf32>
    %cst_13 = arith.constant 9.99999974E-6 : f32
    %21 = vector.broadcast %cst_13 : f32 to vector<8x1xf32>
    %22 = arith.addf %20, %21 : vector<8x1xf32>
    %23 = math.rsqrt %22 : vector<8x1xf32>
    %24 = vector.broadcast %23 : vector<8x1xf32> to vector<8x32xf32>
    %25 = arith.mulf %15, %24 : vector<8x32xf32>
    %c0_14 = arith.constant 0 : index
    %c0_15 = arith.constant 0 : index
    %26 = vector.load %arg6[%c0_14, %c0_15] : memref<1x32xf32, #tpu.memory_space<vmem>>, vector<1x32xf32>
    %27 = vector.broadcast %26 : vector<1x32xf32> to vector<8x32xf32>
    %28 = arith.mulf %25, %27 : vector<8x32xf32>
    %c0_16 = arith.constant 0 : index
    %c0_17 = arith.constant 0 : index
    %29 = vector.load %arg7[%c0_16, %c0_17] : memref<1x32xf32, #tpu.memory_space<vmem>>, vector<1x32xf32>
    %30 = vector.broadcast %29 : vector<1x32xf32> to vector<8x32xf32>
    %31 = arith.addf %28, %30 : vector<8x32xf32>
    %32 = arith.truncf %31 : vector<8x32xf32> to vector<8x32xbf16>
    %c0_18 = arith.constant 0 : index
    %c0_19 = arith.constant 0 : index
    %33 = vector.load %arg8[%c0_18, %c0_19] : memref<32x128xbf16, #tpu.memory_space<vmem>>, vector<32x128xbf16>
    %cst_20 = arith.constant dense<0.000000e+00> : vector<8x128xf32>
    %34 = tpu.matmul %32, %33, %cst_20 {dimension_numbers = #tpu.dot_dimension_numbers<[1], [0], [0], [1], [0, 0, 1, 1], [], []>} : vector<8x32xbf16>, vector<32x128xbf16>, vector<8x128xf32> -> vector<8x128xf32>
    %c0_21 = arith.constant 0 : index
    %c0_22 = arith.constant 0 : index
    %35 = vector.load %arg9[%c0_21, %c0_22] : memref<1x128xf32, #tpu.memory_space<vmem>>, vector<1x128xf32>
    %36 = vector.broadcast %35 : vector<1x128xf32> to vector<8x128xf32>
    %37 = arith.addf %34, %36 : vector<8x128xf32>
    %cst_23 = arith.constant 5.000000e-01 : f32
    %38 = vector.broadcast %cst_23 : f32 to vector<8x128xf32>
    %39 = arith.mulf %38, %37 : vector<8x128xf32>
    %cst_24 = arith.constant 0.707106769 : f32
    %40 = vector.broadcast %cst_24 : f32 to vector<8x128xf32>
    %41 = arith.mulf %37, %40 : vector<8x128xf32>
    %cst_25 = arith.constant 0.000000e+00 : f32
    %42 = vector.broadcast %cst_25 : f32 to vector<8x128xf32>
    %43 = arith.cmpf oge, %41, %42 : vector<8x128xf32>
    %cst_26 = arith.constant 1.000000e+00 : f32
    %cst_27 = arith.constant -1.000000e+00 : f32
    %44 = vector.broadcast %cst_26 : f32 to vector<8x128xf32>
    %45 = vector.broadcast %cst_27 : f32 to vector<8x128xf32>
    %46 = arith.select %43, %44, %45 : vector<8x128xi1>, vector<8x128xf32>
    %47 = math.absf %41 : vector<8x128xf32>
    %cst_28 = arith.constant 0.327591091 : f32
    %48 = vector.broadcast %cst_28 : f32 to vector<8x128xf32>
    %49 = arith.mulf %48, %47 : vector<8x128xf32>
    %cst_29 = arith.constant 1.000000e+00 : f32
    %50 = vector.broadcast %cst_29 : f32 to vector<8x128xf32>
    %51 = arith.addf %50, %49 : vector<8x128xf32>
    %cst_30 = arith.constant 1.000000e+00 : f32
    %52 = vector.broadcast %cst_30 : f32 to vector<8x128xf32>
    %53 = arith.divf %52, %51 : vector<8x128xf32>
    %cst_31 = arith.constant 1.06140542 : f32
    %54 = vector.broadcast %cst_31 : f32 to vector<8x128xf32>
    %55 = arith.mulf %54, %53 : vector<8x128xf32>
    %cst_32 = arith.constant -1.45315206 : f32
    %56 = vector.broadcast %cst_32 : f32 to vector<8x128xf32>
    %57 = arith.addf %55, %56 : vector<8x128xf32>
    %58 = arith.mulf %57, %53 : vector<8x128xf32>
    %cst_33 = arith.constant 1.42141378 : f32
    %59 = vector.broadcast %cst_33 : f32 to vector<8x128xf32>
    %60 = arith.addf %58, %59 : vector<8x128xf32>
    %61 = arith.mulf %60, %53 : vector<8x128xf32>
    %cst_34 = arith.constant -0.284496725 : f32
    %62 = vector.broadcast %cst_34 : f32 to vector<8x128xf32>
    %63 = arith.addf %61, %62 : vector<8x128xf32>
    %64 = arith.mulf %63, %53 : vector<8x128xf32>
    %cst_35 = arith.constant 0.254829586 : f32
    %65 = vector.broadcast %cst_35 : f32 to vector<8x128xf32>
    %66 = arith.addf %64, %65 : vector<8x128xf32>
    %67 = arith.mulf %66, %53 : vector<8x128xf32>
    %cst_36 = arith.constant 0.000000e+00 : f32
    %68 = vector.broadcast %cst_36 : f32 to vector<8x128xf32>
    %69 = arith.subf %68, %47 : vector<8x128xf32>
    %70 = arith.mulf %69, %47 : vector<8x128xf32>
    %71 = math.exp %70 : vector<8x128xf32>
    %72 = arith.mulf %67, %71 : vector<8x128xf32>
    %cst_37 = arith.constant 1.000000e+00 : f32
    %73 = vector.broadcast %cst_37 : f32 to vector<8x128xf32>
    %74 = arith.subf %73, %72 : vector<8x128xf32>
    %75 = arith.mulf %46, %74 : vector<8x128xf32>
    %cst_38 = arith.constant 1.000000e+00 : f32
    %76 = vector.broadcast %cst_38 : f32 to vector<8x128xf32>
    %77 = arith.addf %76, %75 : vector<8x128xf32>
    %78 = arith.mulf %39, %77 : vector<8x128xf32>
    %79 = arith.truncf %78 : vector<8x128xf32> to vector<8x128xbf16>
    %c0_39 = arith.constant 0 : index
    %c0_40 = arith.constant 0 : index
    %80 = vector.load %arg10[%c0_39, %c0_40] : memref<128x32xbf16, #tpu.memory_space<vmem>>, vector<128x32xbf16>
    %cst_41 = arith.constant dense<0.000000e+00> : vector<8x32xf32>
    %81 = tpu.matmul %79, %80, %cst_41 {dimension_numbers = #tpu.dot_dimension_numbers<[1], [0], [0], [1], [0, 0, 1, 1], [], []>} : vector<8x128xbf16>, vector<128x32xbf16>, vector<8x32xf32> -> vector<8x32xf32>
    %c0_42 = arith.constant 0 : index
    %c0_43 = arith.constant 0 : index
    %82 = vector.load %arg11[%c0_42, %c0_43] : memref<1x32xf32, #tpu.memory_space<vmem>>, vector<1x32xf32>
    %83 = vector.broadcast %82 : vector<1x32xf32> to vector<8x32xf32>
    %84 = arith.addf %81, %83 : vector<8x32xf32>
    %85 = arith.addf %9, %84 : vector<8x32xf32>
    %c0_44 = arith.constant 0 : index
    %c0_45 = arith.constant 0 : index
    %c0_46 = arith.constant 0 : index
    %86 = vector.load %arg12[%c0_44, %c0_45, %c0_46] : memref<1x8x32xf32, #tpu.memory_space<vmem>>, vector<1x8x32xf32>
    %87 = vector.shape_cast %86 : vector<1x8x32xf32> to vector<8x32xf32>
    %88 = vector.shape_cast %85 : vector<8x32xf32> to vector<1x8x32xf32>
    tpu.vector_store %arg12[%c0_44, %c0_45, %c0_46], %88 {strides = array<i32>} : memref<1x8x32xf32, #tpu.memory_space<vmem>>, vector<1x8x32xf32>,
    return
  }
  func.func @transform_0(%arg0: i32, %arg1: i32) -> (i32, i32, i32) {
    %c0_i32 = arith.constant 0 : i32
    %c0_i32_0 = arith.constant 0 : i32
    return %arg0, %arg1, %c0_i32 : i32, i32, i32
  }
  func.func @transform_1(%arg0: i32, %arg1: i32) -> (i32, i32, i32) {
    %c0_i32 = arith.constant 0 : i32
    %c0_i32_0 = arith.constant 0 : i32
    return %arg0, %arg1, %c0_i32 : i32, i32, i32
  }
  func.func @transform_2(%arg0: i32, %arg1: i32) -> (i32, i32) {
    %c0_i32 = arith.constant 0 : i32
    %c0_i32_0 = arith.constant 0 : i32
    %c0_i32_1 = arith.constant 0 : i32
    return %c0_i32, %c0_i32_0 : i32, i32
  }
  func.func @transform_3(%arg0: i32, %arg1: i32) -> (i32, i32) {
    %c0_i32 = arith.constant 0 : i32
    %c0_i32_0 = arith.constant 0 : i32
    %c0_i32_1 = arith.constant 0 : i32
    return %c0_i32, %c0_i32_0 : i32, i32
  }
  func.func @transform_4(%arg0: i32, %arg1: i32) -> (i32, i32) {
    %c0_i32 = arith.constant 0 : i32
    %c0_i32_0 = arith.constant 0 : i32
    %c0_i32_1 = arith.constant 0 : i32
    return %c0_i32, %c0_i32_0 : i32, i32
  }
  func.func @transform_5(%arg0: i32, %arg1: i32) -> (i32, i32) {
    %c0_i32 = arith.constant 0 : i32
    %c0_i32_0 = arith.constant 0 : i32
    %c0_i32_1 = arith.constant 0 : i32
    return %c0_i32, %c0_i32_0 : i32, i32
  }
  func.func @transform_6(%arg0: i32, %arg1: i32) -> (i32, i32) {
    %c0_i32 = arith.constant 0 : i32
    %c0_i32_0 = arith.constant 0 : i32
    %c0_i32_1 = arith.constant 0 : i32
    return %c0_i32, %c0_i32_0 : i32, i32
  }
  func.func @transform_7(%arg0: i32, %arg1: i32) -> (i32, i32) {
    %c0_i32 = arith.constant 0 : i32
    %c0_i32_0 = arith.constant 0 : i32
    %c0_i32_1 = arith.constant 0 : i32
    return %c0_i32, %c0_i32_0 : i32, i32
  }
  func.func @transform_8(%arg0: i32, %arg1: i32) -> (i32, i32) {
    %c0_i32 = arith.constant 0 : i32
    %c0_i32_0 = arith.constant 0 : i32
    %c0_i32_1 = arith.constant 0 : i32
    return %c0_i32, %c0_i32_0 : i32, i32
  }
  func.func @transform_9(%arg0: i32, %arg1: i32) -> (i32, i32) {
    %c0_i32 = arith.constant 0 : i32
    %c0_i32_0 = arith.constant 0 : i32
    %c0_i32_1 = arith.constant 0 : i32
    return %c0_i32, %c0_i32_0 : i32, i32
  }
  func.func @transform_10(%arg0: i32, %arg1: i32) -> (i32, i32, i32) {
    %c0_i32 = arith.constant 0 : i32
    %c0_i32_0 = arith.constant 0 : i32
    return %arg0, %arg1, %c0_i32 : i32, i32, i32
  }
}

</mosaic_0001>

<llo_original>
// kernel: block_forward.3
$region0: #{block_forward.3}
  #allocation0 [shape = 'u32[]', space=smem, size = 0x4, offset = 0x4, fixed_abs, tag = 'smem constant byte address 0x4 - core index']
  #allocation1 [shape = 'u32[72,128]{1,0:T(1,128)}', space=vmem, size = 0x9000, scoped, tag = 'internal scratch']
  %s0 = inlined_call_operand.vmem [shape: f32[2,8,32], index: 0, kind: input, shape index: {}]
  %s1 = inlined_call_operand.vmem [shape: f32[1,32], index: 1, kind: input, shape index: {}]
  %s2 = inlined_call_operand.vmem [shape: f32[1,32], index: 2, kind: input, shape index: {}]
  %s3 = inlined_call_operand.vmem [shape: bf16[32,96], index: 3, kind: input, shape index: {}]
  %s4 = inlined_call_operand.vmem [shape: bf16[2,8,96], index: 4, kind: output, shape index: {}]
  %s5 = sld [smem:[#allocation0]]
  $region49: #{block_forward.3} parent=0
    _
  %s7 = ssub.s32 1, %s5
  %s8 = scalar_select 0, %s7, %s5
  loop: start=0, step=1, limit=4
  $region2: #{block_forward.3} parent=0 // loop_pre_header
    _
  $region3: #{block_forward.3} parent=0 // loop_header
    %s10 = sphi 0, %s14
    %p11 = scmp.ge.s32.totalorder %s10, 4
    %s17 = sphi 0, %s29
    %s18 = sphi 0, %s25
    %s19 = sphi 0, %s17
    %s20 = sphi 0, %s18
    %s21 = sphi 0, %s19
    %s22 = sphi 0, %s20
    %s34 = sphi 0, %s36
    %s37 = sphi 0, %s34
    %s38 = sphi 0, %s37
    %s54 = sphi 0, %s38
    %s58 = sphi 0, %s58
    %s60 = sphi 0, %s58
    %s61 = sphi 0, %s60
    %s75 = sphi 0, %s61
    %s79 = sphi 0, %s79
    %s81 = sphi 0, %s79
    %s82 = sphi 0, %s81
    %s96 = sphi 0, %s82
    %s100 = sphi 0, %s100
    %s102 = sphi 0, %s100
    %s103 = sphi 0, %s102
    %s117 = sphi 0, %s103
    %s125 = sphi 0, %s127
    %s128 = sphi 0, %s125
    %s129 = sphi 0, %s128
    %s145 = sphi 0, %s129
  $region4: #{block_forward.3} parent=0 // loop_header_branch
    %13 = sbr.rel (%p11) target = $region8
  $region5: #{block_forward.3} parent=0 // loop_body
    %s15 = ssub.s32 %s10, 1
    %s16 = ssub.s32 %s10, 2
    %s23 = sadd.s32 1, %s18
    %p24 = scmp.ge.s32.totalorder %s23, 1
    %s25 = scalar_select %p24, 0, %s23
    %s26 = sadd.s32 1, %s17
    %s27 = scalar_select %p24, %s26, %s17
    %p28 = scmp.ge.s32.totalorder %s27, 2
    %s29 = scalar_select %p28, 0, %s27
    %s30 = ssub.s32 %s17, %s29
    %s31 = ssub.s32 %s18, %s25
    %s32 = sor.u32 %s30, %s31
    %p33 = scmp.eq.s32.totalorder %s32, 0
    %s35 = sadd.s32 %s34, 1
    %s36 = scalar_select %p33, %s34, %s35
    %p39 = pneg %p33
    %p40 = scmp.eq.s32.totalorder %s10, 1
    %p41 = por %p39, %p40
    %p42 = scmp.ne.s32.totalorder %s34, %s37
    %p43 = scmp.eq.s32.totalorder %s10, 0
    %p44 = por %p42, %p43
    %p45 = scmp.ne.s32.totalorder %s34, %s37
    %p46 = scmp.eq.s32.totalorder %s15, 1
    %p47 = por %p45, %p46
    %p48 = scmp.ne.s32.totalorder %s37, %s38
    %p49 = scmp.eq.s32.totalorder %s15, 0
    %p50 = por %p48, %p49
    %p51 = scmp.ne.s32.totalorder %s37, %s38
    %p52 = scmp.eq.s32.totalorder %s16, 1
    %p53 = por %p51, %p52
    %p55 = scmp.ne.s32.totalorder %s38, %s54
    %p56 = scmp.eq.s32.totalorder %s16, 0
    %p57 = por %p55, %p56
    %s59 = sadd.s32 %s58, 1
    %p62 = scmp.eq.s32.totalorder %s10, 1
    %p63 = scmp.ne.s32.totalorder %s58, %s60
    %p64 = scmp.eq.s32.totalorder %s10, 0
    %p65 = por %p63, %p64
    %p66 = scmp.ne.s32.totalorder %s58, %s60
    %p67 = scmp.eq.s32.totalorder %s15, 1
    %p68 = por %p66, %p67
    %p69 = scmp.ne.s32.totalorder %s60, %s61
    %p70 = scmp.eq.s32.totalorder %s15, 0
    %p71 = por %p69, %p70
    %p72 = scmp.ne.s32.totalorder %s60, %s61
    %p73 = scmp.eq.s32.totalorder %s16, 1
    %p74 = por %p72, %p73
    %p76 = scmp.ne.s32.totalorder %s61, %s75
    %p77 = scmp.eq.s32.totalorder %s16, 0
    %p78 = por %p76, %p77
    %s80 = sadd.s32 %s79, 1
    %p83 = scmp.eq.s32.totalorder %s10, 1
    %p84 = scmp.ne.s32.totalorder %s79, %s81
    %p85 = scmp.eq.s32.totalorder %s10, 0
    %p86 = por %p84, %p85
    %p87 = scmp.ne.s32.totalorder %s79, %s81
    %p88 = scmp.eq.s32.totalorder %s15, 1
    %p89 = por %p87, %p88
    %p90 = scmp.ne.s32.totalorder %s81, %s82
    %p91 = scmp.eq.s32.totalorder %s15, 0
    %p92 = por %p90, %p91
    %p93 = scmp.ne.s32.totalorder %s81, %s82
    %p94 = scmp.eq.s32.totalorder %s16, 1
    %p95 = por %p93, %p94
    %p97 = scmp.ne.s32.totalorder %s82, %s96
    %p98 = scmp.eq.s32.totalorder %s16, 0
    %p99 = por %p97, %p98
    %s101 = sadd.s32 %s100, 1
    %p104 = scmp.eq.s32.totalorder %s10, 1
    %p105 = scmp.ne.s32.totalorder %s100, %s102
    %p106 = scmp.eq.s32.totalorder %s10, 0
    %p107 = por %p105, %p106
    %p108 = scmp.ne.s32.totalorder %s100, %s102
    %p109 = scmp.eq.s32.totalorder %s15, 1
    %p110 = por %p108, %p109
    %p111 = scmp.ne.s32.totalorder %s102, %s103
    %p112 = scmp.eq.s32.totalorder %s15, 0
    %p113 = por %p111, %p112
    %p114 = scmp.ne.s32.totalorder %s102, %s103
    %p115 = scmp.eq.s32.totalorder %s16, 1
    %p116 = por %p114, %p115
    %p118 = scmp.ne.s32.totalorder %s103, %s117
    %p119 = scmp.eq.s32.totalorder %s16, 0
    %p120 = por %p118, %p119
    %s121 = ssub.s32 %s17, %s29
    %s122 = ssub.s32 %s18, %s25
    %s123 = sor.u32 %s121, %s122
    %p124 = scmp.eq.s32.totalorder %s123, 0
    %s126 = sadd.s32 %s125, 1
    %s127 = scalar_select %p124, %s125, %s126
    %p130 = pneg %p124
    %p131 = scmp.eq.s32.totalorder %s10, 1
    %p132 = por %p130, %p131
    %p133 = scmp.ne.s32.totalorder %s125, %s128
    %p134 = scmp.eq.s32.totalorder %s10, 0
    %p135 = por %p133, %p134
    %p136 = scmp.ne.s32.totalorder %s125, %s128
    %p137 = scmp.eq.s32.totalorder %s15, 1
    %p138 = por %p136, %p137
    %p139 = scmp.ne.s32.totalorder %s128, %s129
    %p140 = scmp.eq.s32.totalorder %s15, 0
    %p141 = por %p139, %p140
    %p142 = scmp.ne.s32.totalorder %s128, %s129
    %p143 = scmp.eq.s32.totalorder %s16, 1
    %p144 = por %p142, %p143
    %p146 = scmp.ne.s32.totalorder %s129, %s145
    %p147 = scmp.eq.s32.totalorder %s16, 0
    %p148 = por %p146, %p147
    %p149 = scmp.le.s32.totalorder 1, %s10
    %p150 = scmp.lt.s32.totalorder %s10, 3
    %p151 = pnand %p149, %p150
    %p152 = pneg %p151
    // Predicated region
    $region9: #{block_forward.3} parent=5 // pred_check
      _
    $region10: #{block_forward.3} parent=5 // pred_check_branch
      %154 = sbr.rel (%p151) target = $region12
    $region11: #{block_forward.3} parent=5 // pred_region
      %s155 = ssub.s32 %s10, 1
      // Predicated region
      $region13: #{block_forward.3} parent=11 // pred_check
        %p156 = pneg %p71
      $region14: #{block_forward.3} parent=11 // pred_check_branch
        %158 = sbr.rel (%p156) target = $region16
      $region15: #{block_forward.3} parent=11 // pred_region
        _
      $region16: #{block_forward.3} parent=11 // pred_fallthru
        _
      // Predicated region
      $region17: #{block_forward.3} parent=11 // pred_check
        %p159 = pneg %p92
      $region18: #{block_forward.3} parent=11 // pred_check_branch
        %161 = sbr.rel (%p159) target = $region20
      $region19: #{block_forward.3} parent=11 // pred_region
        _
      $region20: #{block_forward.3} parent=11 // pred_fallthru
        _
      // Predicated region
      $region21: #{block_forward.3} parent=11 // pred_check
        %p162 = pneg %p113
      $region22: #{block_forward.3} parent=11 // pred_check_branch
        %164 = sbr.rel (%p162) target = $region24
      $region23: #{block_forward.3} parent=11 // pred_region
        _
      $region24: #{block_forward.3} parent=11 // pred_fallthru
        _
    $region12: #{block_forward.3} parent=5 // pred_fallthru
      _
    %p165 = scmp.lt.s32.totalorder %s10, 2
    // Predicated region
    $region25: #{block_forward.3} parent=5 // pred_check
      %p166 = pneg %p165
    $region26: #{block_forward.3} parent=5 // pred_check_branch
      %168 = sbr.rel (%p166) target = $region28
    $region27: #{block_forward.3} parent=5 // pred_region
      // Predicated region
      $region29: #{block_forward.3} parent=27 // pred_check
        %p169 = pneg %p44
      $region30: #{block_forward.3} parent=27 // pred_check_branch
        %171 = sbr.rel (%p169) target = $region32
      $region31: #{block_forward.3} parent=27 // pred_region
        %p172 = scmp.lt.s32.totalorder %s17, 1
        %s173 = scalar_select %p172, %s17, 1
        %p174 = scmp.lt.s32.totalorder %s18, 0
        %s175 = scalar_select %p174, %s18, 0
        %s176 = sadd.s32 %s175, %s173
        %s177 = smul.addr %s176, 8
        %s178 = scalar_lea.vmem %s0, %s177
      $region32: #{block_forward.3} parent=27 // pred_fallthru
        _
    $region28: #{block_forward.3} parent=5 // pred_fallthru
      _
    %p179 = scmp.le.s32.totalorder 1, %s10
    %p180 = scmp.lt.s32.totalorder %s10, 3
    %p181 = pnand %p179, %p180
    %p182 = pneg %p181
    // Predicated region
    $region33: #{block_forward.3} parent=5 // pred_check
      _
    $region34: #{block_forward.3} parent=5 // pred_check_branch
      %184 = sbr.rel (%p181) target = $region36
    $region35: #{block_forward.3} parent=5 // pred_region
      %s185 = ssub.s32 %s10, 1
      %p186 = scmp.lt.s32.totalorder %s19, 1
      %s187 = scalar_select %p186, %s19, 1
      %p188 = scmp.lt.s32.totalorder %s20, 0
      %s189 = scalar_select %p188, %s20, 0
      %s190 = sadd.s32 %s189, %s187
      %s191 = smul.addr %s190, 8
      %s192 = scalar_lea.vmem %s0, %s191
      %p193 = pneg %p50
      %p194 = pneg %p47
      %p195 = pneg %p71
      %p196 = pneg %p68
      %p197 = pneg %p92
      %p198 = pneg %p89
      %p199 = pneg %p113
      %p200 = pneg %p110
      %p201 = pneg %p141
      %p202 = pneg %p138
      %p203 = scmp.lt.s32.totalorder %s19, 1
      %s204 = scalar_select %p203, %s19, 1
      %p205 = scmp.lt.s32.totalorder %s20, 0
      %s206 = scalar_select %p205, %s20, 0
      %s207 = sadd.s32 %s206, %s204
      %s208 = smul.addr %s207, 4
      %s209 = scalar_lea.vmem %s4, %s208
      %p210 = scmp.lt.s32.totalorder %s19, 1
      %s211 = scalar_select %p210, %s19, 1
      %p212 = scmp.lt.s32.totalorder %s20, 0
      %s213 = scalar_select %p212, %s20, 0
      %s214 = sadd.s32 %s213, %s211
      %s215 = smul.addr %s214, 8
      %s216 = scalar_lea.vmem %s0, %s215
      %p217 = scmp.lt.s32.totalorder %s19, 1
      %s218 = scalar_select %p217, %s19, 1
      %p219 = scmp.lt.s32.totalorder %s20, 0
      %s220 = scalar_select %p219, %s20, 0
      %s221 = sadd.s32 %s220, %s218
      %s222 = smul.addr %s221, 4
      %s223 = scalar_lea.vmem %s4, %s222
      %v225 = vld [vmem:[%s216] sm:$0xff]
      %vm226 = vcmask 261120
      %v227 = vsel %vm226, %v225, 0.0
      %228 = vadd.xlane.f32.xlu0 %v227
      %v229 = vpop.xlane.xlu0 %228
      %v230 = vrcp.pop 32.0
      %v231 = vmul.f32 32.0, %v230
      %v232 = vsub.f32 1.0, %v231
      %v233 = vmul.f32 %v230, %v232
      %v234 = vadd.f32 %v230, %v233
      %vm235 = vweird.f32 %v230
      %v236 = vsel %vm235, %v230, %v234
      %v237 = vmul.f32 %v229, %v236
      %v238 = vsub.f32 %v225, %v237
      %v239 = vmul.f32 %v238, %v238
      %v240 = vsel %vm226, %v239, 0.0
      %241 = vadd.xlane.f32.xlu0 %v240
      %v242 = vpop.xlane.xlu0 %241
      %v243 = vmul.f32 %v242, %v236
      %v244 = vadd.f32 %v243, 1e-05
      %v245 = vrsqrt.pop %v244
      %v246 = vmul.f32 %v245, %v244
      %v247 = vmul.f32 %v246, %v245
      %v248 = vmul.f32 0.5, %v247
      %v249 = vsub.f32 1.5, %v248
      %v250 = vmul.f32 %v245, %v249
      %vm251 = vweird.f32 %v244
      %vm252 = vweird.f32 %v245
      %vm253 = vmor %vm251, %vm252
      %v254 = vsel %vm253, %v245, %v250
      %v255 = vmul.f32 %v238, %v254
      %v256 = vld [vmem:[%s1] sm:$0x1]
      %v258 = vperm.slane %v256, 0
      %v260 = vmul.f32 %v255, %v258
      %v261 = vld [vmem:[%s2] sm:$0x1]
      %v263 = vperm.slane %v261, 0
      %v265 = vadd.f32 %v260, %v263
      %v266 = vpack.c.bf16 %v265, %v265
      %v267 = vld [vmem:[%s3] sm:$0xf]
      %v268 = vld [vmem:[%s3 + $0x4] sm:$0xf]
      %v269 = vld [vmem:[%s3 + $0x8] sm:$0xf]
      %v270 = vld [vmem:[%s3 + $0xc] sm:$0xf]
      %v275 = vunpack.c.l.b16 %v267
      %v276 = vunpack.c.l.b16 %v268
      %v277 = vunpack.c.l.b16 %v269
      %v278 = vunpack.c.l.b16 %v270
      %v279 = vpack.c.b16 %v276, %v275
      %v280 = vpack.c.b16 %v278, %v277
      %v284 = vsel %vm226, %v266, 0
      %286 = vmatpush.bf16.msra.mxu0 0
      %287 = vmatpush.bf16.msra.mxu0 0
      %288 = vmatpush.bf16.msra.mxu0 0
      %289 = vmatpush.bf16.msra.mxu0 0
      %290 = vmatpush.bf16.msra.mxu0 0
      %291 = vmatpush.bf16.msra.mxu0 0
      %292 = vmatpush.bf16.msra.mxu0 %v280
      %293 = vmatpush.bf16.msra.mxu0 %v279
      %294 = vmatmul.bf16.gmra.mxu0 %v284
      %v295 = vpop.f32.mrf.mxu0
      %v296 = vadd.f32 0.0, %v295
      %v297 = vpop.f32.mrf.mxu0
      %298 = vdwg.mxu0
      %v299 = vpack.c.bf16 %v296, %v296
      %vm300 = vcmask 781312
      %301 = vst.msk [vmem:[%s223] sm:$0xf] %vm300, %v299
      %p302 = scmp.lt.s32.totalorder %s19, 1
      %s303 = scalar_select %p302, %s19, 1
      %p304 = scmp.lt.s32.totalorder %s20, 0
      %s305 = scalar_select %p304, %s20, 0
      %s306 = sadd.s32 %s305, %s303
      %s307 = smul.addr %s306, 4
      %s308 = scalar_lea.vmem %s4, %s307
      // Predicated region
      $region37: #{block_forward.3} parent=35 // pred_check
        %p309 = pneg %p138
      $region38: #{block_forward.3} parent=35 // pred_check_branch
        %311 = sbr.rel (%p309) target = $region40
      $region39: #{block_forward.3} parent=35 // pred_region
        _
      $region40: #{block_forward.3} parent=35 // pred_fallthru
        _
    $region36: #{block_forward.3} parent=5 // pred_fallthru
      _
    %p312 = scmp.le.s32.totalorder 2, %s10
    // Predicated region
    $region41: #{block_forward.3} parent=5 // pred_check
      %p313 = pneg %p312
    $region42: #{block_forward.3} parent=5 // pred_check_branch
      %315 = sbr.rel (%p313) target = $region44
    $region43: #{block_forward.3} parent=5 // pred_region
      %s316 = ssub.s32 %s10, 2
      // Predicated region
      $region45: #{block_forward.3} parent=43 // pred_check
        %p317 = pneg %p144
      $region46: #{block_forward.3} parent=43 // pred_check_branch
        %319 = sbr.rel (%p317) target = $region48
      $region47: #{block_forward.3} parent=43 // pred_region
        %p320 = scmp.lt.s32.totalorder %s21, 1
        %s321 = scalar_select %p320, %s21, 1
        %p322 = scmp.lt.s32.totalorder %s22, 0
        %s323 = scalar_select %p322, %s22, 0
        %s324 = sadd.s32 %s323, %s321
        %s325 = smul.addr %s324, 4
        %s326 = scalar_lea.vmem %s4, %s325
      $region48: #{block_forward.3} parent=43 // pred_fallthru
        _
    $region44: #{block_forward.3} parent=5 // pred_fallthru
      _
  $region6: #{block_forward.3} parent=0 // loop_footer
    %s14 = sadd.s32 1, %s10
  $region7: #{block_forward.3} parent=0 // loop_footer_branch
    %9 = sbr.rel target = $region3
  $region8: #{block_forward.3} parent=0 // loop_exit
    _

// kernel: block_forward.4
$region0: #{block_forward.4}
  #allocation0 [shape = 'u32[]', space=smem, size = 0x4, offset = 0x4, fixed_abs, tag = 'smem constant byte address 0x4 - core index']
  #allocation1 [shape = 'u32[72,128]{1,0:T(1,128)}', space=vmem, size = 0x9000, scoped, tag = 'internal scratch']
  #allocation2 [shape = 'f32[4,8,1]{2,1,0:T(8,128)}', space=vmem, size = 0x4000, scoped, tag = 'scratch operand']
  #allocation3 [shape = 'f32[4,8,1]{2,1,0:T(8,128)}', space=vmem, size = 0x4000, scoped, tag = 'scratch operand']
  #allocation4 [shape = 'f32[4,8,8]{2,1,0:T(8,128)}', space=vmem, size = 0x4000, scoped, tag = 'scratch operand']
  %s0 = inlined_call_operand.vmem [shape: bf16[2,4,8,8], index: 0, kind: input, shape index: {}]
  %s1 = inlined_call_operand.vmem [shape: bf16[2,4,8,8], index: 1, kind: input, shape index: {}]
  %s2 = inlined_call_operand.vmem [shape: bf16[2,4,8,8], index: 2, kind: input, shape index: {}]
  %s3 = inlined_call_operand.vmem [shape: bf16[2,4,8,8], index: 3, kind: output, shape index: {}]
  %s4 = sld [smem:[#allocation0]]
  $region53: #{block_forward.4} parent=0
    _
  %s6 = ssub.s32 1, %s4
  %s7 = scalar_select 0, %s6, %s4
  loop: start=0, step=1, limit=4
  $region2: #{block_forward.4} parent=0 // loop_pre_header
    _
  $region3: #{block_forward.4} parent=0 // loop_header
    %s9 = sphi 0, %s13
    %p10 = scmp.ge.s32.totalorder %s9, 4
    %s16 = sphi 0, %s35
    %s17 = sphi 0, %s31
    %s18 = sphi 0, %s27
    %s19 = sphi 0, %s16
    %s20 = sphi 0, %s17
    %s21 = sphi 0, %s18
    %s22 = sphi 0, %s19
    %s23 = sphi 0, %s20
    %s24 = sphi 0, %s21
    %s40 = sphi 0, %s42
    %s43 = sphi 0, %s40
    %s44 = sphi 0, %s43
    %s60 = sphi 0, %s44
    %s68 = sphi 0, %s70
    %s71 = sphi 0, %s68
    %s72 = sphi 0, %s71
    %s88 = sphi 0, %s72
    %s96 = sphi 0, %s98
    %s99 = sphi 0, %s96
    %s100 = sphi 0, %s99
    %s116 = sphi 0, %s100
    %s124 = sphi 0, %s126
    %s127 = sphi 0, %s124
    %s128 = sphi 0, %s127
    %s144 = sphi 0, %s128
  $region4: #{block_forward.4} parent=0 // loop_header_branch
    %12 = sbr.rel (%p10) target = $region8
  $region5: #{block_forward.4} parent=0 // loop_body
    %s14 = ssub.s32 %s9, 1
    %s15 = ssub.s32 %s9, 2
    %s25 = sadd.s32 1, %s18
    %p26 = scmp.ge.s32.totalorder %s25, 1
    %s27 = scalar_select %p26, 0, %s25
    %s28 = sadd.s32 1, %s17
    %s29 = scalar_select %p26, %s28, %s17
    %p30 = scmp.ge.s32.totalorder %s29, 1
    %s31 = scalar_select %p30, 0, %s29
    %s32 = sadd.s32 1, %s16
    %s33 = scalar_select %p30, %s32, %s16
    %p34 = scmp.ge.s32.totalorder %s33, 2
    %s35 = scalar_select %p34, 0, %s33
    %s36 = ssub.s32 %s16, %s35
    %s37 = ssub.s32 %s17, %s31
    %s38 = sor.u32 %s36, %s37
    %p39 = scmp.eq.s32.totalorder %s38, 0
    %s41 = sadd.s32 %s40, 1
    %s42 = scalar_select %p39, %s40, %s41
    %p45 = pneg %p39
    %p46 = scmp.eq.s32.totalorder %s9, 1
    %p47 = por %p45, %p46
    %p48 = scmp.ne.s32.totalorder %s40, %s43
    %p49 = scmp.eq.s32.totalorder %s9, 0
    %p50 = por %p48, %p49
    %p51 = scmp.ne.s32.totalorder %s40, %s43
    %p52 = scmp.eq.s32.totalorder %s14, 1
    %p53 = por %p51, %p52
    %p54 = scmp.ne.s32.totalorder %s43, %s44
    %p55 = scmp.eq.s32.totalorder %s14, 0
    %p56 = por %p54, %p55
    %p57 = scmp.ne.s32.totalorder %s43, %s44
    %p58 = scmp.eq.s32.totalorder %s15, 1
    %p59 = por %p57, %p58
    %p61 = scmp.ne.s32.totalorder %s44, %s60
    %p62 = scmp.eq.s32.totalorder %s15, 0
    %p63 = por %p61, %p62
    %s64 = ssub.s32 %s16, %s35
    %s65 = ssub.s32 %s18, %s27
    %s66 = sor.u32 %s64, %s65
    %p67 = scmp.eq.s32.totalorder %s66, 0
    %s69 = sadd.s32 %s68, 1
    %s70 = scalar_select %p67, %s68, %s69
    %p73 = pneg %p67
    %p74 = scmp.eq.s32.totalorder %s9, 1
    %p75 = por %p73, %p74
    %p76 = scmp.ne.s32.totalorder %s68, %s71
    %p77 = scmp.eq.s32.totalorder %s9, 0
    %p78 = por %p76, %p77
    %p79 = scmp.ne.s32.totalorder %s68, %s71
    %p80 = scmp.eq.s32.totalorder %s14, 1
    %p81 = por %p79, %p80
    %p82 = scmp.ne.s32.totalorder %s71, %s72
    %p83 = scmp.eq.s32.totalorder %s14, 0
    %p84 = por %p82, %p83
    %p85 = scmp.ne.s32.totalorder %s71, %s72
    %p86 = scmp.eq.s32.totalorder %s15, 1
    %p87 = por %p85, %p86
    %p89 = scmp.ne.s32.totalorder %s72, %s88
    %p90 = scmp.eq.s32.totalorder %s15, 0
    %p91 = por %p89, %p90
    %s92 = ssub.s32 %s16, %s35
    %s93 = ssub.s32 %s18, %s27
    %s94 = sor.u32 %s92, %s93
    %p95 = scmp.eq.s32.totalorder %s94, 0
    %s97 = sadd.s32 %s96, 1
    %s98 = scalar_select %p95, %s96, %s97
    %p101 = pneg %p95
    %p102 = scmp.eq.s32.totalorder %s9, 1
    %p103 = por %p101, %p102
    %p104 = scmp.ne.s32.totalorder %s96, %s99
    %p105 = scmp.eq.s32.totalorder %s9, 0
    %p106 = por %p104, %p105
    %p107 = scmp.ne.s32.totalorder %s96, %s99
    %p108 = scmp.eq.s32.totalorder %s14, 1
    %p109 = por %p107, %p108
    %p110 = scmp.ne.s32.totalorder %s99, %s100
    %p111 = scmp.eq.s32.totalorder %s14, 0
    %p112 = por %p110, %p111
    %p113 = scmp.ne.s32.totalorder %s99, %s100
    %p114 = scmp.eq.s32.totalorder %s15, 1
    %p115 = por %p113, %p114
    %p117 = scmp.ne.s32.totalorder %s100, %s116
    %p118 = scmp.eq.s32.totalorder %s15, 0
    %p119 = por %p117, %p118
    %s120 = ssub.s32 %s16, %s35
    %s121 = ssub.s32 %s17, %s31
    %s122 = sor.u32 %s120, %s121
    %p123 = scmp.eq.s32.totalorder %s122, 0
    %s125 = sadd.s32 %s124, 1
    %s126 = scalar_select %p123, %s124, %s125
    %p129 = pneg %p123
    %p130 = scmp.eq.s32.totalorder %s9, 1
    %p131 = por %p129, %p130
    %p132 = scmp.ne.s32.totalorder %s124, %s127
    %p133 = scmp.eq.s32.totalorder %s9, 0
    %p134 = por %p132, %p133
    %p135 = scmp.ne.s32.totalorder %s124, %s127
    %p136 = scmp.eq.s32.totalorder %s14, 1
    %p137 = por %p135, %p136
    %p138 = scmp.ne.s32.totalorder %s127, %s128
    %p139 = scmp.eq.s32.totalorder %s14, 0
    %p140 = por %p138, %p139
    %p141 = scmp.ne.s32.totalorder %s127, %s128
    %p142 = scmp.eq.s32.totalorder %s15, 1
    %p143 = por %p141, %p142
    %p145 = scmp.ne.s32.totalorder %s128, %s144
    %p146 = scmp.eq.s32.totalorder %s15, 0
    %p147 = por %p145, %p146
    %p148 = scmp.le.s32.totalorder 1, %s9
    %p149 = scmp.lt.s32.totalorder %s9, 3
    %p150 = pnand %p148, %p149
    %p151 = pneg %p150
    // Predicated region
    $region9: #{block_forward.4} parent=5 // pred_check
      _
    $region10: #{block_forward.4} parent=5 // pred_check_branch
      %153 = sbr.rel (%p150) target = $region12
    $region11: #{block_forward.4} parent=5 // pred_region
      %s154 = ssub.s32 %s9, 1
    $region12: #{block_forward.4} parent=5 // pred_fallthru
      _
    %p155 = scmp.lt.s32.totalorder %s9, 2
    // Predicated region
    $region13: #{block_forward.4} parent=5 // pred_check
      %p156 = pneg %p155
    $region14: #{block_forward.4} parent=5 // pred_check_branch
      %158 = sbr.rel (%p156) target = $region16
    $region15: #{block_forward.4} parent=5 // pred_region
      // Predicated region
      $region17: #{block_forward.4} parent=15 // pred_check
        %p159 = pneg %p50
      $region18: #{block_forward.4} parent=15 // pred_check_branch
        %161 = sbr.rel (%p159) target = $region20
      $region19: #{block_forward.4} parent=15 // pred_region
        %p162 = scmp.lt.s32.totalorder %s16, 1
        %s163 = scalar_select %p162, %s16, 1
        %p164 = scmp.lt.s32.totalorder %s17, 0
        %s165 = scalar_select %p164, %s17, 0
        %s166 = smul.addr %s163, 4
        %s167 = sadd.s32 %s165, %s166
        %s168 = smul.addr %s167, 4
        %s169 = scalar_lea.vmem %s0, %s168
      $region20: #{block_forward.4} parent=15 // pred_fallthru
        _
      // Predicated region
      $region21: #{block_forward.4} parent=15 // pred_check
        %p170 = pneg %p78
      $region22: #{block_forward.4} parent=15 // pred_check_branch
        %172 = sbr.rel (%p170) target = $region24
      $region23: #{block_forward.4} parent=15 // pred_region
        %p173 = scmp.lt.s32.totalorder %s16, 1
        %s174 = scalar_select %p173, %s16, 1
        %p175 = scmp.lt.s32.totalorder %s18, 0
        %s176 = scalar_select %p175, %s18, 0
        %s177 = smul.addr %s174, 4
        %s178 = sadd.s32 %s176, %s177
        %s179 = smul.addr %s178, 4
        %s180 = scalar_lea.vmem %s1, %s179
      $region24: #{block_forward.4} parent=15 // pred_fallthru
        _
      // Predicated region
      $region25: #{block_forward.4} parent=15 // pred_check
        %p181 = pneg %p106
      $region26: #{block_forward.4} parent=15 // pred_check_branch
        %183 = sbr.rel (%p181) target = $region28
      $region27: #{block_forward.4} parent=15 // pred_region
        %p184 = scmp.lt.s32.totalorder %s16, 1
        %s185 = scalar_select %p184, %s16, 1
        %p186 = scmp.lt.s32.totalorder %s18, 0
        %s187 = scalar_select %p186, %s18, 0
        %s188 = smul.addr %s185, 4
        %s189 = sadd.s32 %s187, %s188
        %s190 = smul.addr %s189, 4
        %s191 = scalar_lea.vmem %s2, %s190
      $region28: #{block_forward.4} parent=15 // pred_fallthru
        _
    $region16: #{block_forward.4} parent=5 // pred_fallthru
      _
    %p192 = scmp.le.s32.totalorder 1, %s9
    %p193 = scmp.lt.s32.totalorder %s9, 3
    %p194 = pnand %p192, %p193
    %p195 = pneg %p194
    // Predicated region
    $region29: #{block_forward.4} parent=5 // pred_check
      _
    $region30: #{block_forward.4} parent=5 // pred_check_branch
      %197 = sbr.rel (%p194) target = $region32
    $region31: #{block_forward.4} parent=5 // pred_region
      %s198 = ssub.s32 %s9, 1
      %p199 = scmp.lt.s32.totalorder %s19, 1
      %s200 = scalar_select %p199, %s19, 1
      %p201 = scmp.lt.s32.totalorder %s20, 0
      %s202 = scalar_select %p201, %s20, 0
      %s203 = smul.addr %s200, 4
      %s204 = sadd.s32 %s202, %s203
      %s205 = smul.addr %s204, 4
      %s206 = scalar_lea.vmem %s0, %s205
      %p207 = pneg %p56
      %p208 = pneg %p53
      %p209 = scmp.lt.s32.totalorder %s19, 1
      %s210 = scalar_select %p209, %s19, 1
      %p211 = scmp.lt.s32.totalorder %s21, 0
      %s212 = scalar_select %p211, %s21, 0
      %s213 = smul.addr %s210, 4
      %s214 = sadd.s32 %s212, %s213
      %s215 = smul.addr %s214, 4
      %s216 = scalar_lea.vmem %s1, %s215
      %p217 = pneg %p84
      %p218 = pneg %p81
      %p219 = scmp.lt.s32.totalorder %s19, 1
      %s220 = scalar_select %p219, %s19, 1
      %p221 = scmp.lt.s32.totalorder %s21, 0
      %s222 = scalar_select %p221, %s21, 0
      %s223 = smul.addr %s220, 4
      %s224 = sadd.s32 %s222, %s223
      %s225 = smul.addr %s224, 4
      %s226 = scalar_lea.vmem %s2, %s225
      %p227 = pneg %p112
      %p228 = pneg %p109
      %p229 = pneg %p140
      %p230 = pneg %p137
      %p231 = scmp.lt.s32.totalorder %s19, 1
      %s232 = scalar_select %p231, %s19, 1
      %p233 = scmp.lt.s32.totalorder %s20, 0
      %s234 = scalar_select %p233, %s20, 0
      %s235 = smul.addr %s232, 4
      %s236 = sadd.s32 %s234, %s235
      %s237 = smul.addr %s236, 4
      %s238 = scalar_lea.vmem %s3, %s237
      %p239 = scmp.lt.s32.totalorder %s19, 1
      %s240 = scalar_select %p239, %s19, 1
      %p241 = scmp.lt.s32.totalorder %s20, 0
      %s242 = scalar_select %p241, %s20, 0
      %s243 = smul.addr %s240, 4
      %s244 = sadd.s32 %s242, %s243
      %s245 = smul.addr %s244, 4
      %s246 = scalar_lea.vmem %s0, %s245
      %p247 = scmp.lt.s32.totalorder %s19, 1
      %s248 = scalar_select %p247, %s19, 1
      %p249 = scmp.lt.s32.totalorder %s21, 0
      %s250 = scalar_select %p249, %s21, 0
      %s251 = smul.addr %s248, 4
      %s252 = sadd.s32 %s250, %s251
      %s253 = smul.addr %s252, 4
      %s254 = scalar_lea.vmem %s1, %s253
      %p255 = scmp.lt.s32.totalorder %s19, 1
      %s256 = scalar_select %p255, %s19, 1
      %p257 = scmp.lt.s32.totalorder %s21, 0
      %s258 = scalar_select %p257, %s21, 0
      %s259 = smul.addr %s256, 4
      %s260 = sadd.s32 %s258, %s259
      %s261 = smul.addr %s260, 4
      %s262 = scalar_lea.vmem %s2, %s261
      %p263 = scmp.lt.s32.totalorder %s19, 1
      %s264 = scalar_select %p263, %s19, 1
      %p265 = scmp.lt.s32.totalorder %s20, 0
      %s266 = scalar_select %p265, %s20, 0
      %s267 = smul.addr %s264, 4
      %s268 = sadd.s32 %s266, %s267
      %s269 = smul.addr %s268, 4
      %s270 = scalar_lea.vmem %s3, %s269
      %p272 = scmp.eq.s32.totalorder %s21, 0
      // Predicated region
      $region33: #{block_forward.4} parent=31 // pred_check
        %p273 = pneg %p272
      $region34: #{block_forward.4} parent=31 // pred_check_branch
        %275 = sbr.rel (%p273) target = $region36
      $region35: #{block_forward.4} parent=31 // pred_region
        %vm276 = vcmask 7168
        %277 = vst.msk [vmem:[#allocation2] sm:$0xff] %vm276, -inf
        %278 = vst.msk [vmem:[#allocation2 + $0x8] sm:$0xff] %vm276, -inf
        %279 = vst.msk [vmem:[#allocation2 + $0x10] sm:$0xff] %vm276, -inf
        %280 = vst.msk [vmem:[#allocation2 + $0x18] sm:$0xff] %vm276, -inf
        %281 = vst.msk [vmem:[#allocation3] sm:$0xff] %vm276, 0.0
        %282 = vst.msk [vmem:[#allocation3 + $0x8] sm:$0xff] %vm276, 0.0
        %283 = vst.msk [vmem:[#allocation3 + $0x10] sm:$0xff] %vm276, 0.0
        %284 = vst.msk [vmem:[#allocation3 + $0x18] sm:$0xff] %vm276, 0.0
        %vm285 = vcmask 64512
        %286 = vst.msk [vmem:[#allocation4] sm:$0xff] %vm285, 0.0
        %287 = vst.msk [vmem:[#allocation4 + $0x8] sm:$0xff] %vm285, 0.0
        %288 = vst.msk [vmem:[#allocation4 + $0x10] sm:$0xff] %vm285, 0.0
        %289 = vst.msk [vmem:[#allocation4 + $0x18] sm:$0xff] %vm285, 0.0
      $region36: #{block_forward.4} parent=31 // pred_fallthru
        _
      %v290 = vld [vmem:[%s246] sm:$0xf]
      %v291 = vld [vmem:[%s246 + $0x4] sm:$0xf]
      %v292 = vld [vmem:[%s246 + $0x8] sm:$0xf]
      %v293 = vld [vmem:[%s246 + $0xc] sm:$0xf]
      %v294 = vld [vmem:[%s254] sm:$0xf]
      %v295 = vld [vmem:[%s254 + $0x4] sm:$0xf]
      %v296 = vld [vmem:[%s254 + $0x8] sm:$0xf]
      %v297 = vld [vmem:[%s254 + $0xc] sm:$0xf]
      %vm298 = vcmask 64512
      %v300 = vsel %vm298, %v290, 0
      %v303 = vsel %vm298, %v294, 0
      %305 = vmatpush.bf16.xpose.msra.mxu0 0
      %306 = vmatpush.bf16.xpose.msra.mxu0 0
      %307 = vmatpush.bf16.xpose.msra.mxu0 0
      %308 = vmatpush.bf16.xpose.msra.mxu0 0
      %309 = vmatpush.bf16.xpose.msra.mxu0 0
      %310 = vmatpush.bf16.xpose.msra.mxu0 0
      %311 = vmatpush.bf16.xpose.msra.mxu0 0
      %312 = vmatpush.bf16.xpose.msra.mxu0 %v303
      %313 = vmatmul.bf16.gmra.mxu0 %v300
      %v314 = vpop.f32.mrf.mxu0
      %v315 = vadd.f32 0.0, %v314
      %v316 = vpop.f32.mrf.mxu0
      %317 = vdwg.mxu0
      %v319 = vsel %vm298, %v291, 0
      %v322 = vsel %vm298, %v295, 0
      %324 = vmatpush.bf16.xpose.msra.mxu0 0
      %325 = vmatpush.bf16.xpose.msra.mxu0 0
      %326 = vmatpush.bf16.xpose.msra.mxu0 0
      %327 = vmatpush.bf16.xpose.msra.mxu0 0
      %328 = vmatpush.bf16.xpose.msra.mxu0 0
      %329 = vmatpush.bf16.xpose.msra.mxu0 0
      %330 = vmatpush.bf16.xpose.msra.mxu0 0
      %331 = vmatpush.bf16.xpose.msra.mxu0 %v322
      %332 = vmatmul.bf16.gmra.mxu0 %v319
      %v333 = vpop.f32.mrf.mxu0
      %v334 = vadd.f32 0.0, %v333
      %v335 = vpop.f32.mrf.mxu0
      %336 = vdwg.mxu0
      %v338 = vsel %vm298, %v292, 0
      %v341 = vsel %vm298, %v296, 0
      %343 = vmatpush.bf16.xpose.msra.mxu0 0
      %344 = vmatpush.bf16.xpose.msra.mxu0 0
      %345 = vmatpush.bf16.xpose.msra.mxu0 0
      %346 = vmatpush.bf16.xpose.msra.mxu0 0
      %347 = vmatpush.bf16.xpose.msra.mxu0 0
      %348 = vmatpush.bf16.xpose.msra.mxu0 0
      %349 = vmatpush.bf16.xpose.msra.mxu0 0
      %350 = vmatpush.bf16.xpose.msra.mxu0 %v341
      %351 = vmatmul.bf16.gmra.mxu0 %v338
      %v352 = vpop.f32.mrf.mxu0
      %v353 = vadd.f32 0.0, %v352
      %v354 = vpop.f32.mrf.mxu0
      %355 = vdwg.mxu0
      %v357 = vsel %vm298, %v293, 0
      %v360 = vsel %vm298, %v297, 0
      %362 = vmatpush.bf16.xpose.msra.mxu0 0
      %363 = vmatpush.bf16.xpose.msra.mxu0 0
      %364 = vmatpush.bf16.xpose.msra.mxu0 0
      %365 = vmatpush.bf16.xpose.msra.mxu0 0
      %366 = vmatpush.bf16.xpose.msra.mxu0 0
      %367 = vmatpush.bf16.xpose.msra.mxu0 0
      %368 = vmatpush.bf16.xpose.msra.mxu0 0
      %369 = vmatpush.bf16.xpose.msra.mxu0 %v360
      %370 = vmatmul.bf16.gmra.mxu0 %v357
      %v371 = vpop.f32.mrf.mxu0
      %v372 = vadd.f32 0.0, %v371
      %v373 = vpop.f32.mrf.mxu0
      %374 = vdwg.mxu0
      %v375 = vmul.f32 %v315, 0.35355338
      %v376 = vmul.f32 %v334, 0.35355338
      %v377 = vmul.f32 %v353, 0.35355338
      %v378 = vmul.f32 %v372, 0.35355338
      %v379 = vld [vmem:[#allocation2] sm:$0xff]
      %v380 = vld [vmem:[#allocation2 + $0x8] sm:$0xff]
      %v381 = vld [vmem:[#allocation2 + $0x10] sm:$0xff]
      %v382 = vld [vmem:[#allocation2 + $0x18] sm:$0xff]
      %v383 = vsel %vm298, %v375, -inf
      %384 = vmax.xlane.f32.xlu0 %v383
      %v385 = vpop.xlane.xlu0 %384
      %v386 = vsel %vm298, %v376, -inf
      %387 = vmax.xlane.f32.xlu0 %v386
      %v388 = vpop.xlane.xlu0 %387
      %v389 = vsel %vm298, %v377, -inf
      %390 = vmax.xlane.f32.xlu0 %v389
      %v391 = vpop.xlane.xlu0 %390
      %v392 = vsel %vm298, %v378, -inf
      %393 = vmax.xlane.f32.xlu0 %v392
      %v394 = vpop.xlane.xlu0 %393
      %v395 = vmax.f32 %v379, %v385
      %v396 = vmax.f32 %v380, %v388
      %v397 = vmax.f32 %v381, %v391
      %v398 = vmax.f32 %v382, %v394
      %v399 = vsub.f32 %v379, %v395
      %v400 = vsub.f32 %v380, %v396
      %v401 = vsub.f32 %v381, %v397
      %v402 = vsub.f32 %v382, %v398
      %v403 = vmul.f32 %v399, 1.442695
      %v404 = vpow.pop %v403
      %v405 = vmul.f32 %v400, 1.442695
      %v406 = vpow.pop %v405
      %v407 = vmul.f32 %v401, 1.442695
      %v408 = vpow.pop %v407
      %v409 = vmul.f32 %v402, 1.442695
      %v410 = vpow.pop %v409
      %412 = vset.pattern.permute.xlu0 0
      %413 = vperm.xlu0 %412, %v395
      %v414 = vpop.permute.xlu0 %413
      %417 = vset.pattern.permute.xlu0 0
      %418 = vperm.xlu0 %417, %v396
      %v419 = vpop.permute.xlu0 %418
      %422 = vset.pattern.permute.xlu0 0
      %423 = vperm.xlu0 %422, %v397
      %v424 = vpop.permute.xlu0 %423
      %427 = vset.pattern.permute.xlu0 0
      %428 = vperm.xlu0 %427, %v398
      %v429 = vpop.permute.xlu0 %428
      %v431 = vsub.f32 %v375, %v414
      %v432 = vsub.f32 %v376, %v419
      %v433 = vsub.f32 %v377, %v424
      %v434 = vsub.f32 %v378, %v429
      %v435 = vmul.f32 %v431, 1.442695
      %v436 = vpow.pop %v435
      %v437 = vmul.f32 %v432, 1.442695
      %v438 = vpow.pop %v437
      %v439 = vmul.f32 %v433, 1.442695
      %v440 = vpow.pop %v439
      %v441 = vmul.f32 %v434, 1.442695
      %v442 = vpow.pop %v441
      %v443 = vld [vmem:[#allocation3] sm:$0xff]
      %v444 = vld [vmem:[#allocation3 + $0x8] sm:$0xff]
      %v445 = vld [vmem:[#allocation3 + $0x10] sm:$0xff]
      %v446 = vld [vmem:[#allocation3 + $0x18] sm:$0xff]
      %v447 = vmul.f32 %v404, %v443
      %v448 = vmul.f32 %v406, %v444
      %v449 = vmul.f32 %v408, %v445
      %v450 = vmul.f32 %v410, %v446
      %v451 = vsel %vm298, %v436, 0.0
      %452 = vadd.xlane.f32.xlu0 %v451
      %v453 = vpop.xlane.xlu0 %452
      %v454 = vsel %vm298, %v438, 0.0
      %455 = vadd.xlane.f32.xlu0 %v454
      %v456 = vpop.xlane.xlu0 %455
      %v457 = vsel %vm298, %v440, 0.0
      %458 = vadd.xlane.f32.xlu0 %v457
      %v459 = vpop.xlane.xlu0 %458
      %v460 = vsel %vm298, %v442, 0.0
      %461 = vadd.xlane.f32.xlu0 %v460
      %v462 = vpop.xlane.xlu0 %461
      %v463 = vadd.f32 %v447, %v453
      %v464 = vadd.f32 %v448, %v456
      %v465 = vadd.f32 %v449, %v459
      %v466 = vadd.f32 %v450, %v462
      %vm467 = vcmask 7168
      %468 = vst.msk [vmem:[#allocation3] sm:$0xff] %vm467, %v463
      %469 = vst.msk [vmem:[#allocation3 + $0x8] sm:$0xff] %vm467, %v464
      %470 = vst.msk [vmem:[#allocation3 + $0x10] sm:$0xff] %vm467, %v465
      %471 = vst.msk [vmem:[#allocation3 + $0x18] sm:$0xff] %vm467, %v466
      %v472 = vld [vmem:[#allocation4] sm:$0xff]
      %v473 = vld [vmem:[#allocation4 + $0x8] sm:$0xff]
      %v474 = vld [vmem:[#allocation4 + $0x10] sm:$0xff]
      %v475 = vld [vmem:[#allocation4 + $0x18] sm:$0xff]
      %477 = vset.pattern.permute.xlu0 0
      %478 = vperm.xlu0 %477, %v404
      %v479 = vpop.permute.xlu0 %478
      %482 = vset.pattern.permute.xlu0 0
      %483 = vperm.xlu0 %482, %v406
      %v484 = vpop.permute.xlu0 %483
      %487 = vset.pattern.permute.xlu0 0
      %488 = vperm.xlu0 %487, %v408
      %v489 = vpop.permute.xlu0 %488
      %492 = vset.pattern.permute.xlu0 0
      %493 = vperm.xlu0 %492, %v410
      %v494 = vpop.permute.xlu0 %493
      %v496 = vmul.f32 %v479, %v472
      %v497 = vmul.f32 %v484, %v473
      %v498 = vmul.f32 %v489, %v474
      %v499 = vmul.f32 %v494, %v475
      %v500 = vpack.c.bf16 %v436, %v436
      %v501 = vpack.c.bf16 %v438, %v438
      %v502 = vpack.c.bf16 %v440, %v440
      %v503 = vpack.c.bf16 %v442, %v442
      %v504 = vld [vmem:[%s262] sm:$0xf]
      %v505 = vld [vmem:[%s262 + $0x4] sm:$0xf]
      %v506 = vld [vmem:[%s262 + $0x8] sm:$0xf]
      %v507 = vld [vmem:[%s262 + $0xc] sm:$0xf]
      %v509 = vsel %vm298, %v500, 0
      %vm511 = vcmask 1043456
      %v513 = vsel %vm511, %v504, 0
      %515 = vmatpush.bf16.msra.mxu0 0
      %516 = vmatpush.bf16.msra.mxu0 0
      %517 = vmatpush.bf16.msra.mxu0 0
      %518 = vmatpush.bf16.msra.mxu0 0
      %519 = vmatpush.bf16.msra.mxu0 0
      %520 = vmatpush.bf16.msra.mxu0 0
      %521 = vmatpush.bf16.msra.mxu0 0
      %522 = vmatpush.bf16.msra.mxu0 %v513
      %523 = vmatmul.bf16.gmra.mxu0 %v509
      %v524 = vpop.f32.mrf.mxu0
      %v525 = vadd.f32 0.0, %v524
      %v526 = vpop.f32.mrf.mxu0
      %527 = vdwg.mxu0
      %v529 = vsel %vm298, %v501, 0
      %v532 = vsel %vm511, %v505, 0
      %534 = vmatpush.bf16.msra.mxu0 0
      %535 = vmatpush.bf16.msra.mxu0 0
      %536 = vmatpush.bf16.msra.mxu0 0
      %537 = vmatpush.bf16.msra.mxu0 0
      %538 = vmatpush.bf16.msra.mxu0 0
      %539 = vmatpush.bf16.msra.mxu0 0
      %540 = vmatpush.bf16.msra.mxu0 0
      %541 = vmatpush.bf16.msra.mxu0 %v532
      %542 = vmatmul.bf16.gmra.mxu0 %v529
      %v543 = vpop.f32.mrf.mxu0
      %v544 = vadd.f32 0.0, %v543
      %v545 = vpop.f32.mrf.mxu0
      %546 = vdwg.mxu0
      %v548 = vsel %vm298, %v502, 0
      %v551 = vsel %vm511, %v506, 0
      %553 = vmatpush.bf16.msra.mxu0 0
      %554 = vmatpush.bf16.msra.mxu0 0
      %555 = vmatpush.bf16.msra.mxu0 0
      %556 = vmatpush.bf16.msra.mxu0 0
      %557 = vmatpush.bf16.msra.mxu0 0
      %558 = vmatpush.bf16.msra.mxu0 0
      %559 = vmatpush.bf16.msra.mxu0 0
      %560 = vmatpush.bf16.msra.mxu0 %v551
      %561 = vmatmul.bf16.gmra.mxu0 %v548
      %v562 = vpop.f32.mrf.mxu0
      %v563 = vadd.f32 0.0, %v562
      %v564 = vpop.f32.mrf.mxu0
      %565 = vdwg.mxu0
      %v567 = vsel %vm298, %v503, 0
      %v570 = vsel %vm511, %v507, 0
      %572 = vmatpush.bf16.msra.mxu0 0
      %573 = vmatpush.bf16.msra.mxu0 0
      %574 = vmatpush.bf16.msra.mxu0 0
      %575 = vmatpush.bf16.msra.mxu0 0
      %576 = vmatpush.bf16.msra.mxu0 0
      %577 = vmatpush.bf16.msra.mxu0 0
      %578 = vmatpush.bf16.msra.mxu0 0
      %579 = vmatpush.bf16.msra.mxu0 %v570
      %580 = vmatmul.bf16.gmra.mxu0 %v567
      %v581 = vpop.f32.mrf.mxu0
      %v582 = vadd.f32 0.0, %v581
      %v583 = vpop.f32.mrf.mxu0
      %584 = vdwg.mxu0
      %v585 = vadd.f32 %v496, %v525
      %v586 = vadd.f32 %v497, %v544
      %v587 = vadd.f32 %v498, %v563
      %v588 = vadd.f32 %v499, %v582
      %589 = vst.msk [vmem:[#allocation4] sm:$0xff] %vm298, %v585
      %590 = vst.msk [vmem:[#allocation4 + $0x8] sm:$0xff] %vm298, %v586
      %591 = vst.msk [vmem:[#allocation4 + $0x10] sm:$0xff] %vm298, %v587
      %592 = vst.msk [vmem:[#allocation4 + $0x18] sm:$0xff] %vm298, %v588
      %593 = vst.msk [vmem:[#allocation2] sm:$0xff] %vm467, %v395
      %594 = vst.msk [vmem:[#allocation2 + $0x8] sm:$0xff] %vm467, %v396
      %595 = vst.msk [vmem:[#allocation2 + $0x10] sm:$0xff] %vm467, %v397
      %596 = vst.msk [vmem:[#allocation2 + $0x18] sm:$0xff] %vm467, %v398
      // Predicated region
      $region37: #{block_forward.4} parent=31 // pred_check
        %p597 = pneg %p272
      $region38: #{block_forward.4} parent=31 // pred_check_branch
        %599 = sbr.rel (%p597) target = $region40
      $region39: #{block_forward.4} parent=31 // pred_region
        %v600 = vld [vmem:[#allocation3] sm:$0xff]
        %v601 = vld [vmem:[#allocation3 + $0x8] sm:$0xff]
        %v602 = vld [vmem:[#allocation3 + $0x10] sm:$0xff]
        %v603 = vld [vmem:[#allocation3 + $0x18] sm:$0xff]
        %v604 = vrcp.pop %v600
        %v605 = vrcp.pop %v601
        %v606 = vrcp.pop %v602
        %v607 = vrcp.pop %v603
        %v608 = vld [vmem:[#allocation4] sm:$0xff]
        %v609 = vld [vmem:[#allocation4 + $0x8] sm:$0xff]
        %v610 = vld [vmem:[#allocation4 + $0x10] sm:$0xff]
        %v611 = vld [vmem:[#allocation4 + $0x18] sm:$0xff]
        %613 = vset.pattern.permute.xlu0 0
        %614 = vperm.xlu0 %613, %v604
        %v615 = vpop.permute.xlu0 %614
        %618 = vset.pattern.permute.xlu0 0
        %619 = vperm.xlu0 %618, %v605
        %v620 = vpop.permute.xlu0 %619
        %623 = vset.pattern.permute.xlu0 0
        %624 = vperm.xlu0 %623, %v606
        %v625 = vpop.permute.xlu0 %624
        %628 = vset.pattern.permute.xlu0 0
        %629 = vperm.xlu0 %628, %v607
        %v630 = vpop.permute.xlu0 %629
        %v632 = vmul.f32 %v608, %v615
        %v633 = vmul.f32 %v609, %v620
        %v634 = vmul.f32 %v610, %v625
        %v635 = vmul.f32 %v611, %v630
        %v636 = vpack.c.bf16 %v632, %v632
        %v637 = vpack.c.bf16 %v633, %v633
        %v638 = vpack.c.bf16 %v634, %v634
        %v639 = vpack.c.bf16 %v635, %v635
        %vm640 = vcmask 60416
        %641 = vst.msk [vmem:[%s270] sm:$0xf] %vm640, %v636
        %642 = vst.msk [vmem:[%s270 + $0x4] sm:$0xf] %vm640, %v637
        %643 = vst.msk [vmem:[%s270 + $0x8] sm:$0xf] %vm640, %v638
        %644 = vst.msk [vmem:[%s270 + $0xc] sm:$0xf] %vm640, %v639
      $region40: #{block_forward.4} parent=31 // pred_fallthru
        _
      %p645 = scmp.lt.s32.totalorder %s19, 1
      %s646 = scalar_select %p645, %s19, 1
      %p647 = scmp.lt.s32.totalorder %s20, 0
      %s648 = scalar_select %p647, %s20, 0
      %s649 = smul.addr %s646, 4
      %s650 = sadd.s32 %s648, %s649
      %s651 = smul.addr %s650, 4
      %s652 = scalar_lea.vmem %s3, %s651
      // Predicated region
      $region41: #{block_forward.4} parent=31 // pred_check
        %p653 = pneg %p137
      $region42: #{block_forward.4} parent=31 // pred_check_branch
        %655 = sbr.rel (%p653) target = $region44
      $region43: #{block_forward.4} parent=31 // pred_region
        _
      $region44: #{block_forward.4} parent=31 // pred_fallthru
        _
    $region32: #{block_forward.4} parent=5 // pred_fallthru
      _
    %p656 = scmp.le.s32.totalorder 2, %s9
    // Predicated region
    $region45: #{block_forward.4} parent=5 // pred_check
      %p657 = pneg %p656
    $region46: #{block_forward.4} parent=5 // pred_check_branch
      %659 = sbr.rel (%p657) target = $region48
    $region47: #{block_forward.4} parent=5 // pred_region
      %s660 = ssub.s32 %s9, 2
      // Predicated region
      $region49: #{block_forward.4} parent=47 // pred_check
        %p661 = pneg %p143
      $region50: #{block_forward.4} parent=47 // pred_check_branch
        %663 = sbr.rel (%p661) target = $region52
      $region51: #{block_forward.4} parent=47 // pred_region
        %p664 = scmp.lt.s32.totalorder %s22, 1
        %s665 = scalar_select %p664, %s22, 1
        %p666 = scmp.lt.s32.totalorder %s23, 0
        %s667 = scalar_select %p666, %s23, 0
        %s668 = smul.addr %s665, 4
        %s669 = sadd.s32 %s667, %s668
        %s670 = smul.addr %s669, 4
        %s671 = scalar_lea.vmem %s3, %s670
      $region52: #{block_forward.4} parent=47 // pred_fallthru
        _
    $region48: #{block_forward.4} parent=5 // pred_fallthru
      _
  $region6: #{block_forward.4} parent=0 // loop_footer
    %s13 = sadd.s32 1, %s9
  $region7: #{block_forward.4} parent=0 // loop_footer_branch
    %8 = sbr.rel target = $region3
  $region8: #{block_forward.4} parent=0 // loop_exit
    _

// kernel: block_forward.5
$region0: #{block_forward.5}
  #allocation0 [shape = 'u32[]', space=smem, size = 0x4, offset = 0x4, fixed_abs, tag = 'smem constant byte address 0x4 - core index']
  #allocation1 [shape = 'u32[72,128]{1,0:T(1,128)}', space=vmem, size = 0x9000, scoped, tag = 'internal scratch']
  %s0 = inlined_call_operand.vmem [shape: f32[2,8,32], index: 0, kind: input, shape index: {}]
  %s1 = inlined_call_operand.vmem [shape: bf16[2,8,32], index: 1, kind: input, shape index: {}]
  %s2 = inlined_call_operand.vmem [shape: bf16[32,32], index: 2, kind: input, shape index: {}]
  %s3 = inlined_call_operand.vmem [shape: f32[1,32], index: 3, kind: input, shape index: {}]
  %s4 = inlined_call_operand.vmem [shape: f32[1,32], index: 4, kind: input, shape index: {}]
  %s5 = inlined_call_operand.vmem [shape: f32[1,32], index: 5, kind: input, shape index: {}]
  %s6 = inlined_call_operand.vmem [shape: bf16[32,128], index: 6, kind: input, shape index: {}]
  %s7 = inlined_call_operand.vmem [shape: f32[1,128], index: 7, kind: input, shape index: {}]
  %s8 = inlined_call_operand.vmem [shape: bf16[128,32], index: 8, kind: input, shape index: {}]
  %s9 = inlined_call_operand.vmem [shape: f32[1,32], index: 9, kind: input, shape index: {}]
  %s10 = inlined_call_operand.hbm [shape: f32[2,8,32], index: 10, kind: output, shape index: {}]
  %s11 = sld [smem:[#allocation0]]
  $region73: #{block_forward.5} parent=0
    _
  %s13 = ssub.s32 1, %s11
  %s14 = scalar_select 0, %s13, %s11
  $region1: #{block_forward.5} parent=0
    #allocation2 [shape = 'u8[8192]{0}', space=vmem, size = 0x2000, scoped, tag = 'output window, operand 0']
    #allocation3 [shape = 's32[2]{0}', space=sflag, size = 0x8, scoped, tag = 'scoped memory for block_forward.5']
    %15 = vsyncpa [#allocation3], 0
    %s16 = scalar_lea.sflag [#allocation3], 1
    %17 = vsyncpa %s16, 0
    loop: start=0, step=1, limit=4
    $region2: #{block_forward.5} parent=1 // loop_pre_header
      _
    $region3: #{block_forward.5} parent=1 // loop_header
      %s19 = sphi 0, %s23
      %p20 = scmp.ge.s32.totalorder %s19, 4
      %s26 = sphi 0, %s38
      %s27 = sphi 0, %s34
      %s28 = sphi 0, %s26
      %s29 = sphi 0, %s27
      %s30 = sphi 0, %s28
      %s31 = sphi 0, %s29
      %s43 = sphi 0, %s45
      %s46 = sphi 0, %s43
      %s47 = sphi 0, %s46
      %s63 = sphi 0, %s47
      %s71 = sphi 0, %s73
      %s74 = sphi 0, %s71
      %s75 = sphi 0, %s74
      %s91 = sphi 0, %s75
      %s95 = sphi 0, %s95
      %s97 = sphi 0, %s95
      %s98 = sphi 0, %s97
      %s112 = sphi 0, %s98
      %s116 = sphi 0, %s116
      %s118 = sphi 0, %s116
      %s119 = sphi 0, %s118
      %s133 = sphi 0, %s119
      %s137 = sphi 0, %s137
      %s139 = sphi 0, %s137
      %s140 = sphi 0, %s139
      %s154 = sphi 0, %s140
      %s158 = sphi 0, %s158
      %s160 = sphi 0, %s158
      %s161 = sphi 0, %s160
      %s175 = sphi 0, %s161
      %s179 = sphi 0, %s179
      %s181 = sphi 0, %s179
      %s182 = sphi 0, %s181
      %s196 = sphi 0, %s182
      %s200 = sphi 0, %s200
      %s202 = sphi 0, %s200
      %s203 = sphi 0, %s202
      %s217 = sphi 0, %s203
      %s221 = sphi 0, %s221
      %s223 = sphi 0, %s221
      %s224 = sphi 0, %s223
      %s238 = sphi 0, %s224
      %s242 = sphi 0, %s242
      %s244 = sphi 0, %s242
      %s245 = sphi 0, %s244
      %s259 = sphi 0, %s245
      %s267 = sphi 0, %s269
      %s270 = sphi 0, %s267
      %s271 = sphi 0, %s270
      %s287 = sphi 0, %s271
    $region4: #{block_forward.5} parent=1 // loop_header_branch
      %22 = sbr.rel (%p20) target = $region8
    $region5: #{block_forward.5} parent=1 // loop_body
      %s24 = ssub.s32 %s19, 1
      %s25 = ssub.s32 %s19, 2
      %s32 = sadd.s32 1, %s27
      %p33 = scmp.ge.s32.totalorder %s32, 1
      %s34 = scalar_select %p33, 0, %s32
      %s35 = sadd.s32 1, %s26
      %s36 = scalar_select %p33, %s35, %s26
      %p37 = scmp.ge.s32.totalorder %s36, 2
      %s38 = scalar_select %p37, 0, %s36
      %s39 = ssub.s32 %s26, %s38
      %s40 = ssub.s32 %s27, %s34
      %s41 = sor.u32 %s39, %s40
      %p42 = scmp.eq.s32.totalorder %s41, 0
      %s44 = sadd.s32 %s43, 1
      %s45 = scalar_select %p42, %s43, %s44
      %p48 = pneg %p42
      %p49 = scmp.eq.s32.totalorder %s19, 1
      %p50 = por %p48, %p49
      %p51 = scmp.ne.s32.totalorder %s43, %s46
      %p52 = scmp.eq.s32.totalorder %s19, 0
      %p53 = por %p51, %p52
      %p54 = scmp.ne.s32.totalorder %s43, %s46
      %p55 = scmp.eq.s32.totalorder %s24, 1
      %p56 = por %p54, %p55
      %p57 = scmp.ne.s32.totalorder %s46, %s47
      %p58 = scmp.eq.s32.totalorder %s24, 0
      %p59 = por %p57, %p58
      %p60 = scmp.ne.s32.totalorder %s46, %s47
      %p61 = scmp.eq.s32.totalorder %s25, 1
      %p62 = por %p60, %p61
      %p64 = scmp.ne.s32.totalorder %s47, %s63
      %p65 = scmp.eq.s32.totalorder %s25, 0
      %p66 = por %p64, %p65
      %s67 = ssub.s32 %s26, %s38
      %s68 = ssub.s32 %s27, %s34
      %s69 = sor.u32 %s67, %s68
      %p70 = scmp.eq.s32.totalorder %s69, 0
      %s72 = sadd.s32 %s71, 1
      %s73 = scalar_select %p70, %s71, %s72
      %p76 = pneg %p70
      %p77 = scmp.eq.s32.totalorder %s19, 1
      %p78 = por %p76, %p77
      %p79 = scmp.ne.s32.totalorder %s71, %s74
      %p80 = scmp.eq.s32.totalorder %s19, 0
      %p81 = por %p79, %p80
      %p82 = scmp.ne.s32.totalorder %s71, %s74
      %p83 = scmp.eq.s32.totalorder %s24, 1
      %p84 = por %p82, %p83
      %p85 = scmp.ne.s32.totalorder %s74, %s75
      %p86 = scmp.eq.s32.totalorder %s24, 0
      %p87 = por %p85, %p86
      %p88 = scmp.ne.s32.totalorder %s74, %s75
      %p89 = scmp.eq.s32.totalorder %s25, 1
      %p90 = por %p88, %p89
      %p92 = scmp.ne.s32.totalorder %s75, %s91
      %p93 = scmp.eq.s32.totalorder %s25, 0
      %p94 = por %p92, %p93
      %s96 = sadd.s32 %s95, 1
      %p99 = scmp.eq.s32.totalorder %s19, 1
      %p100 = scmp.ne.s32.totalorder %s95, %s97
      %p101 = scmp.eq.s32.totalorder %s19, 0
      %p102 = por %p100, %p101
      %p103 = scmp.ne.s32.totalorder %s95, %s97
      %p104 = scmp.eq.s32.totalorder %s24, 1
      %p105 = por %p103, %p104
      %p106 = scmp.ne.s32.totalorder %s97, %s98
      %p107 = scmp.eq.s32.totalorder %s24, 0
      %p108 = por %p106, %p107
      %p109 = scmp.ne.s32.totalorder %s97, %s98
      %p110 = scmp.eq.s32.totalorder %s25, 1
      %p111 = por %p109, %p110
      %p113 = scmp.ne.s32.totalorder %s98, %s112
      %p114 = scmp.eq.s32.totalorder %s25, 0
      %p115 = por %p113, %p114
      %s117 = sadd.s32 %s116, 1
      %p120 = scmp.eq.s32.totalorder %s19, 1
      %p121 = scmp.ne.s32.totalorder %s116, %s118
      %p122 = scmp.eq.s32.totalorder %s19, 0
      %p123 = por %p121, %p122
      %p124 = scmp.ne.s32.totalorder %s116, %s118
      %p125 = scmp.eq.s32.totalorder %s24, 1
      %p126 = por %p124, %p125
      %p127 = scmp.ne.s32.totalorder %s118, %s119
      %p128 = scmp.eq.s32.totalorder %s24, 0
      %p129 = por %p127, %p128
      %p130 = scmp.ne.s32.totalorder %s118, %s119
      %p131 = scmp.eq.s32.totalorder %s25, 1
      %p132 = por %p130, %p131
      %p134 = scmp.ne.s32.totalorder %s119, %s133
      %p135 = scmp.eq.s32.totalorder %s25, 0
      %p136 = por %p134, %p135
      %s138 = sadd.s32 %s137, 1
      %p141 = scmp.eq.s32.totalorder %s19, 1
      %p142 = scmp.ne.s32.totalorder %s137, %s139
      %p143 = scmp.eq.s32.totalorder %s19, 0
      %p144 = por %p142, %p143
      %p145 = scmp.ne.s32.totalorder %s137, %s139
      %p146 = scmp.eq.s32.totalorder %s24, 1
      %p147 = por %p145, %p146
      %p148 = scmp.ne.s32.totalorder %s139, %s140
      %p149 = scmp.eq.s32.totalorder %s24, 0
      %p150 = por %p148, %p149
      %p151 = scmp.ne.s32.totalorder %s139, %s140
      %p152 = scmp.eq.s32.totalorder %s25, 1
      %p153 = por %p151, %p152
      %p155 = scmp.ne.s32.totalorder %s140, %s154
      %p156 = scmp.eq.s32.totalorder %s25, 0
      %p157 = por %p155, %p156
      %s159 = sadd.s32 %s158, 1
      %p162 = scmp.eq.s32.totalorder %s19, 1
      %p163 = scmp.ne.s32.totalorder %s158, %s160
      %p164 = scmp.eq.s32.totalorder %s19, 0
      %p165 = por %p163, %p164
      %p166 = scmp.ne.s32.totalorder %s158, %s160
      %p167 = scmp.eq.s32.totalorder %s24, 1
      %p168 = por %p166, %p167
      %p169 = scmp.ne.s32.totalorder %s160, %s161
      %p170 = scmp.eq.s32.totalorder %s24, 0
      %p171 = por %p169, %p170
      %p172 = scmp.ne.s32.totalorder %s160, %s161
      %p173 = scmp.eq.s32.totalorder %s25, 1
      %p174 = por %p172, %p173
      %p176 = scmp.ne.s32.totalorder %s161, %s175
      %p177 = scmp.eq.s32.totalorder %s25, 0
      %p178 = por %p176, %p177
      %s180 = sadd.s32 %s179, 1
      %p183 = scmp.eq.s32.totalorder %s19, 1
      %p184 = scmp.ne.s32.totalorder %s179, %s181
      %p185 = scmp.eq.s32.totalorder %s19, 0
      %p186 = por %p184, %p185
      %p187 = scmp.ne.s32.totalorder %s179, %s181
      %p188 = scmp.eq.s32.totalorder %s24, 1
      %p189 = por %p187, %p188
      %p190 = scmp.ne.s32.totalorder %s181, %s182
      %p191 = scmp.eq.s32.totalorder %s24, 0
      %p192 = por %p190, %p191
      %p193 = scmp.ne.s32.totalorder %s181, %s182
      %p194 = scmp.eq.s32.totalorder %s25, 1
      %p195 = por %p193, %p194
      %p197 = scmp.ne.s32.totalorder %s182, %s196
      %p198 = scmp.eq.s32.totalorder %s25, 0
      %p199 = por %p197, %p198
      %s201 = sadd.s32 %s200, 1
      %p204 = scmp.eq.s32.totalorder %s19, 1
      %p205 = scmp.ne.s32.totalorder %s200, %s202
      %p206 = scmp.eq.s32.totalorder %s19, 0
      %p207 = por %p205, %p206
      %p208 = scmp.ne.s32.totalorder %s200, %s202
      %p209 = scmp.eq.s32.totalorder %s24, 1
      %p210 = por %p208, %p209
      %p211 = scmp.ne.s32.totalorder %s202, %s203
      %p212 = scmp.eq.s32.totalorder %s24, 0
      %p213 = por %p211, %p212
      %p214 = scmp.ne.s32.totalorder %s202, %s203
      %p215 = scmp.eq.s32.totalorder %s25, 1
      %p216 = por %p214, %p215
      %p218 = scmp.ne.s32.totalorder %s203, %s217
      %p219 = scmp.eq.s32.totalorder %s25, 0
      %p220 = por %p218, %p219
      %s222 = sadd.s32 %s221, 1
      %p225 = scmp.eq.s32.totalorder %s19, 1
      %p226 = scmp.ne.s32.totalorder %s221, %s223
      %p227 = scmp.eq.s32.totalorder %s19, 0
      %p228 = por %p226, %p227
      %p229 = scmp.ne.s32.totalorder %s221, %s223
      %p230 = scmp.eq.s32.totalorder %s24, 1
      %p231 = por %p229, %p230
      %p232 = scmp.ne.s32.totalorder %s223, %s224
      %p233 = scmp.eq.s32.totalorder %s24, 0
      %p234 = por %p232, %p233
      %p235 = scmp.ne.s32.totalorder %s223, %s224
      %p236 = scmp.eq.s32.totalorder %s25, 1
      %p237 = por %p235, %p236
      %p239 = scmp.ne.s32.totalorder %s224, %s238
      %p240 = scmp.eq.s32.totalorder %s25, 0
      %p241 = por %p239, %p240
      %s243 = sadd.s32 %s242, 1
      %p246 = scmp.eq.s32.totalorder %s19, 1
      %p247 = scmp.ne.s32.totalorder %s242, %s244
      %p248 = scmp.eq.s32.totalorder %s19, 0
      %p249 = por %p247, %p248
      %p250 = scmp.ne.s32.totalorder %s242, %s244
      %p251 = scmp.eq.s32.totalorder %s24, 1
      %p252 = por %p250, %p251
      %p253 = scmp.ne.s32.totalorder %s244, %s245
      %p254 = scmp.eq.s32.totalorder %s24, 0
      %p255 = por %p253, %p254
      %p256 = scmp.ne.s32.totalorder %s244, %s245
      %p257 = scmp.eq.s32.totalorder %s25, 1
      %p258 = por %p256, %p257
      %p260 = scmp.ne.s32.totalorder %s245, %s259
      %p261 = scmp.eq.s32.totalorder %s25, 0
      %p262 = por %p260, %p261
      %s263 = ssub.s32 %s26, %s38
      %s264 = ssub.s32 %s27, %s34
      %s265 = sor.u32 %s263, %s264
      %p266 = scmp.eq.s32.totalorder %s265, 0
      %s268 = sadd.s32 %s267, 1
      %s269 = scalar_select %p266, %s267, %s268
      %p272 = pneg %p266
      %p273 = scmp.eq.s32.totalorder %s19, 1
      %p274 = por %p272, %p273
      %p275 = scmp.ne.s32.totalorder %s267, %s270
      %p276 = scmp.eq.s32.totalorder %s19, 0
      %p277 = por %p275, %p276
      %p278 = scmp.ne.s32.totalorder %s267, %s270
      %p279 = scmp.eq.s32.totalorder %s24, 1
      %p280 = por %p278, %p279
      %p281 = scmp.ne.s32.totalorder %s270, %s271
      %p282 = scmp.eq.s32.totalorder %s24, 0
      %p283 = por %p281, %p282
      %p284 = scmp.ne.s32.totalorder %s270, %s271
      %p285 = scmp.eq.s32.totalorder %s25, 1
      %p286 = por %p284, %p285
      %p288 = scmp.ne.s32.totalorder %s271, %s287
      %p289 = scmp.eq.s32.totalorder %s25, 0
      %p290 = por %p288, %p289
      %p291 = scmp.le.s32.totalorder 1, %s19
      %p292 = scmp.lt.s32.totalorder %s19, 3
      %p293 = pnand %p291, %p292
      %p294 = pneg %p293
      // Predicated region
      $region9: #{block_forward.5} parent=5 // pred_check
        _
      $region10: #{block_forward.5} parent=5 // pred_check_branch
        %296 = sbr.rel (%p293) target = $region12
      $region11: #{block_forward.5} parent=5 // pred_region
        %s297 = ssub.s32 %s19, 1
        // Predicated region
        $region13: #{block_forward.5} parent=11 // pred_check
          %p298 = pneg %p108
        $region14: #{block_forward.5} parent=11 // pred_check_branch
          %300 = sbr.rel (%p298) target = $region16
        $region15: #{block_forward.5} parent=11 // pred_region
          _
        $region16: #{block_forward.5} parent=11 // pred_fallthru
          _
        // Predicated region
        $region17: #{block_forward.5} parent=11 // pred_check
          %p301 = pneg %p129
        $region18: #{block_forward.5} parent=11 // pred_check_branch
          %303 = sbr.rel (%p301) target = $region20
        $region19: #{block_forward.5} parent=11 // pred_region
          _
        $region20: #{block_forward.5} parent=11 // pred_fallthru
          _
        // Predicated region
        $region21: #{block_forward.5} parent=11 // pred_check
          %p304 = pneg %p150
        $region22: #{block_forward.5} parent=11 // pred_check_branch
          %306 = sbr.rel (%p304) target = $region24
        $region23: #{block_forward.5} parent=11 // pred_region
          _
        $region24: #{block_forward.5} parent=11 // pred_fallthru
          _
        // Predicated region
        $region25: #{block_forward.5} parent=11 // pred_check
          %p307 = pneg %p171
        $region26: #{block_forward.5} parent=11 // pred_check_branch
          %309 = sbr.rel (%p307) target = $region28
        $region27: #{block_forward.5} parent=11 // pred_region
          _
        $region28: #{block_forward.5} parent=11 // pred_fallthru
          _
        // Predicated region
        $region29: #{block_forward.5} parent=11 // pred_check
          %p310 = pneg %p192
        $region30: #{block_forward.5} parent=11 // pred_check_branch
          %312 = sbr.rel (%p310) target = $region32
        $region31: #{block_forward.5} parent=11 // pred_region
          _
        $region32: #{block_forward.5} parent=11 // pred_fallthru
          _
        // Predicated region
        $region33: #{block_forward.5} parent=11 // pred_check
          %p313 = pneg %p213
        $region34: #{block_forward.5} parent=11 // pred_check_branch
          %315 = sbr.rel (%p313) target = $region36
        $region35: #{block_forward.5} parent=11 // pred_region
          _
        $region36: #{block_forward.5} parent=11 // pred_fallthru
          _
        // Predicated region
        $region37: #{block_forward.5} parent=11 // pred_check
          %p316 = pneg %p234
        $region38: #{block_forward.5} parent=11 // pred_check_branch
          %318 = sbr.rel (%p316) target = $region40
        $region39: #{block_forward.5} parent=11 // pred_region
          _
        $region40: #{block_forward.5} parent=11 // pred_fallthru
          _
        // Predicated region
        $region41: #{block_forward.5} parent=11 // pred_check
          %p319 = pneg %p255
        $region42: #{block_forward.5} parent=11 // pred_check_branch
          %321 = sbr.rel (%p319) target = $region44
        $region43: #{block_forward.5} parent=11 // pred_region
          _
        $region44: #{block_forward.5} parent=11 // pred_fallthru
          _
      $region12: #{block_forward.5} parent=5 // pred_fallthru
        _
      %p322 = scmp.lt.s32.totalorder %s19, 2
      // Predicated region
      $region45: #{block_forward.5} parent=5 // pred_check
        %p323 = pneg %p322
      $region46: #{block_forward.5} parent=5 // pred_check_branch
        %325 = sbr.rel (%p323) target = $region48
      $region47: #{block_forward.5} parent=5 // pred_region
        // Predicated region
        $region49: #{block_forward.5} parent=47 // pred_check
          %p326 = pneg %p53
        $region50: #{block_forward.5} parent=47 // pred_check_branch
          %328 = sbr.rel (%p326) target = $region52
        $region51: #{block_forward.5} parent=47 // pred_region
          %p329 = scmp.lt.s32.totalorder %s26, 1
          %s330 = scalar_select %p329, %s26, 1
          %p331 = scmp.lt.s32.totalorder %s27, 0
          %s332 = scalar_select %p331, %s27, 0
          %s333 = sadd.s32 %s332, %s330
          %s334 = smul.addr %s333, 8
          %s335 = scalar_lea.vmem %s0, %s334
        $region52: #{block_forward.5} parent=47 // pred_fallthru
          _
        // Predicated region
        $region53: #{block_forward.5} parent=47 // pred_check
          %p336 = pneg %p81
        $region54: #{block_forward.5} parent=47 // pred_check_branch
          %338 = sbr.rel (%p336) target = $region56
        $region55: #{block_forward.5} parent=47 // pred_region
          %p339 = scmp.lt.s32.totalorder %s26, 1
          %s340 = scalar_select %p339, %s26, 1
          %p341 = scmp.lt.s32.totalorder %s27, 0
          %s342 = scalar_select %p341, %s27, 0
          %s343 = sadd.s32 %s342, %s340
          %s344 = smul.addr %s343, 4
          %s345 = scalar_lea.vmem %s1, %s344
        $region56: #{block_forward.5} parent=47 // pred_fallthru
          _
      $region48: #{block_forward.5} parent=5 // pred_fallthru
        _
      %p346 = scmp.le.s32.totalorder 1, %s19
      %p347 = scmp.lt.s32.totalorder %s19, 3
      %p348 = pnand %p346, %p347
      %p349 = pneg %p348
      // Predicated region
      $region57: #{block_forward.5} parent=5 // pred_check
        _
      $region58: #{block_forward.5} parent=5 // pred_check_branch
        %351 = sbr.rel (%p348) target = $region60
      $region59: #{block_forward.5} parent=5 // pred_region
        %s352 = ssub.s32 %s19, 1
        %p353 = scmp.lt.s32.totalorder %s28, 1
        %s354 = scalar_select %p353, %s28, 1
        %p355 = scmp.lt.s32.totalorder %s29, 0
        %s356 = scalar_select %p355, %s29, 0
        %s357 = sadd.s32 %s356, %s354
        %s358 = smul.addr %s357, 8
        %s359 = scalar_lea.vmem %s0, %s358
        %p360 = pneg %p59
        %p361 = pneg %p56
        %p362 = scmp.lt.s32.totalorder %s28, 1
        %s363 = scalar_select %p362, %s28, 1
        %p364 = scmp.lt.s32.totalorder %s29, 0
        %s365 = scalar_select %p364, %s29, 0
        %s366 = sadd.s32 %s365, %s363
        %s367 = smul.addr %s366, 4
        %s368 = scalar_lea.vmem %s1, %s367
        %p369 = pneg %p87
        %p370 = pneg %p84
        %p371 = pneg %p108
        %p372 = pneg %p105
        %p373 = pneg %p129
        %p374 = pneg %p126
        %p375 = pneg %p150
        %p376 = pneg %p147
        %p377 = pneg %p171
        %p378 = pneg %p168
        %p379 = pneg %p192
        %p380 = pneg %p189
        %p381 = pneg %p213
        %p382 = pneg %p210
        %p383 = pneg %p234
        %p384 = pneg %p231
        %p385 = pneg %p255
        %p386 = pneg %p252
        %p387 = pneg %p283
        %p388 = pneg %p280
        %s389 = sand.u32 %s270, 1
        %s390 = scalar_lea.sflag [#allocation3], %s389
        %s391 = sand.u32 %s270, 1
        %s392 = smul.addr %s391, 8
        %s393 = scalar_lea.vmem [#allocation2], %s392
        %p394 = scmp.lt.s32.totalorder %s28, 1
        %s395 = scalar_select %p394, %s28, 1
        %p396 = scmp.lt.s32.totalorder %s29, 0
        %s397 = scalar_select %p396, %s29, 0
        %s398 = sadd.s32 %s397, %s395
        %s399 = smul.addr %s398, 8
        %s400 = scalar_lea.vmem %s0, %s399
        %p401 = scmp.lt.s32.totalorder %s28, 1
        %s402 = scalar_select %p401, %s28, 1
        %p403 = scmp.lt.s32.totalorder %s29, 0
        %s404 = scalar_select %p403, %s29, 0
        %s405 = sadd.s32 %s404, %s402
        %s406 = smul.addr %s405, 4
        %s407 = scalar_lea.vmem %s1, %s406
        %v409 = vld [vmem:[%s400] sm:$0xff]
        %v410 = vld [vmem:[%s407] sm:$0xf]
        %v411 = vld [vmem:[%s2] sm:$0xf]
        %v412 = vld [vmem:[%s2 + $0x4] sm:$0xf]
        %v413 = vld [vmem:[%s2 + $0x8] sm:$0xf]
        %v414 = vld [vmem:[%s2 + $0xc] sm:$0xf]
        %v415 = vld [vmem:[%s3] sm:$0x1]
        %v417 = vperm.slane %v415, 0
        %v423 = vunpack.c.l.b16 %v411
        %v424 = vunpack.c.l.b16 %v412
        %v425 = vunpack.c.l.b16 %v413
        %v426 = vunpack.c.l.b16 %v414
        %v427 = vpack.c.b16 %v424, %v423
        %v428 = vpack.c.b16 %v426, %v425
        %vm431 = vcmask 261120
        %v433 = vsel %vm431, %v410, 0
        %435 = vmatpush.bf16.msra.mxu0 0
        %436 = vmatpush.bf16.msra.mxu0 0
        %437 = vmatpush.bf16.msra.mxu0 0
        %438 = vmatpush.bf16.msra.mxu0 0
        %439 = vmatpush.bf16.msra.mxu0 0
        %440 = vmatpush.bf16.msra.mxu0 0
        %441 = vmatpush.bf16.msra.mxu0 %v428
        %442 = vmatpush.bf16.msra.mxu0 %v427
        %443 = vmatmul.bf16.gmra.mxu0 %v433
        %v444 = vpop.f32.mrf.mxu0
        %v445 = vadd.f32 %v417, %v444
        %v446 = vpop.f32.mrf.mxu0
        %447 = vdwg.mxu0
        %v448 = vadd.f32 %v409, %v445
        %v449 = vsel %vm431, %v448, 0.0
        %450 = vadd.xlane.f32.xlu0 %v449
        %v451 = vpop.xlane.xlu0 %450
        %v452 = vrcp.pop 32.0
        %v453 = vmul.f32 32.0, %v452
        %v454 = vsub.f32 1.0, %v453
        %v455 = vmul.f32 %v452, %v454
        %v456 = vadd.f32 %v452, %v455
        %vm457 = vweird.f32 %v452
        %v458 = vsel %vm457, %v452, %v456
        %v459 = vmul.f32 %v451, %v458
        %v460 = vsub.f32 %v448, %v459
        %v461 = vmul.f32 %v460, %v460
        %v462 = vsel %vm431, %v461, 0.0
        %463 = vadd.xlane.f32.xlu0 %v462
        %v464 = vpop.xlane.xlu0 %463
        %v465 = vmul.f32 %v464, %v458
        %v466 = vadd.f32 %v465, 1e-05
        %v467 = vrsqrt.pop %v466
        %v468 = vmul.f32 %v467, %v466
        %v469 = vmul.f32 %v468, %v467
        %v470 = vmul.f32 0.5, %v469
        %v471 = vsub.f32 1.5, %v470
        %v472 = vmul.f32 %v467, %v471
        %vm473 = vweird.f32 %v466
        %vm474 = vweird.f32 %v467
        %vm475 = vmor %vm473, %vm474
        %v476 = vsel %vm475, %v467, %v472
        %v477 = vmul.f32 %v460, %v476
        %v478 = vld [vmem:[%s4] sm:$0x1]
        %v480 = vperm.slane %v478, 0
        %v482 = vmul.f32 %v477, %v480
        %v483 = vld [vmem:[%s5] sm:$0x1]
        %v485 = vperm.slane %v483, 0
        %v487 = vadd.f32 %v482, %v485
        %v488 = vpack.c.bf16 %v487, %v487
        %v489 = vld [vmem:[%s6] sm:$0xf]
        %v490 = vld [vmem:[%s6 + $0x4] sm:$0xf]
        %v491 = vld [vmem:[%s6 + $0x8] sm:$0xf]
        %v492 = vld [vmem:[%s6 + $0xc] sm:$0xf]
        %v493 = vld [vmem:[%s7] sm:$0x1]
        %v495 = vperm.slane %v493, 0
        %v501 = vunpack.c.l.b16 %v489
        %v502 = vunpack.c.l.b16 %v490
        %v503 = vunpack.c.l.b16 %v491
        %v504 = vunpack.c.l.b16 %v492
        %v505 = vpack.c.b16 %v502, %v501
        %v506 = vpack.c.b16 %v504, %v503
        %v510 = vsel %vm431, %v488, 0
        %512 = vmatpush.bf16.msra.mxu0 0
        %513 = vmatpush.bf16.msra.mxu0 0
        %514 = vmatpush.bf16.msra.mxu0 0
        %515 = vmatpush.bf16.msra.mxu0 0
        %516 = vmatpush.bf16.msra.mxu0 0
        %517 = vmatpush.bf16.msra.mxu0 0
        %518 = vmatpush.bf16.msra.mxu0 %v506
        %519 = vmatpush.bf16.msra.mxu0 %v505
        %520 = vmatmul.bf16.gmra.mxu0 %v510
        %v521 = vpop.f32.mrf.mxu0
        %v522 = vadd.f32 %v495, %v521
        %v523 = vpop.f32.mrf.mxu0
        %524 = vdwg.mxu0
        %v525 = vmul.f32 %v522, 0.5
        %v526 = vmul.f32 %v522, 0.70710677
        %vm527 = vcmp.ge.f32.partialorder %v526, 0.0
        %v528 = vsel %vm527, 1.0, -1.0
        %v529 = vand.u32 2147483647, %v526
        %v530 = vmul.f32 %v529, 0.3275911
        %v531 = vadd.f32 %v530, 1.0
        %v532 = vrcp.pop %v531
        %v533 = vmul.f32 %v531, %v532
        %v534 = vsub.f32 1.0, %v533
        %v535 = vmul.f32 %v532, %v534
        %v536 = vadd.f32 %v532, %v535
        %vm537 = vweird.f32 %v531
        %vm538 = vweird.f32 %v532
        %vm539 = vmor %vm537, %vm538
        %v540 = vsel %vm539, %v532, %v536
        %v541 = vand.u32 2147483647, %v531
        %vm542 = vcmp.eq.f32.partialorder %v541, 8.507059e+37
        %v543 = vand.u32 %v531, 2147483648
        %v544 = vor.u32 1.1754944e-38, %v543
        %v545 = vsel %vm542, %v544, %v540
        %v546 = vmul.f32 1.0, %v545
        %v547 = vmul.f32 %v546, 1.0614054
        %v548 = vadd.f32 %v547, -1.4531521
        %v549 = vmul.f32 %v548, %v546
        %v550 = vadd.f32 %v549, 1.4214138
        %v551 = vmul.f32 %v550, %v546
        %v552 = vadd.f32 %v551, -0.28449672
        %v553 = vmul.f32 %v552, %v546
        %v554 = vadd.f32 %v553, 0.2548296
        %v555 = vmul.f32 %v554, %v546
        %v556 = vsub.f32 0.0, %v529
        %v557 = vmul.f32 %v556, %v529
        %v558 = vmul.f32 %v557, 1.442695
        %v559 = vpow.pop %v558
        %v560 = vmul.f32 %v555, %v559
        %v561 = vsub.f32 1.0, %v560
        %v562 = vmul.f32 %v528, %v561
        %v563 = vadd.f32 %v562, 1.0
        %v564 = vmul.f32 %v525, %v563
        %v565 = vpack.c.bf16 %v564, %v564
        %v566 = vld [vmem:[%s8] sm:$0xf]
        %v567 = vld [vmem:[%s8 + $0x4] sm:$0xf]
        %v568 = vld [vmem:[%s8 + $0x8] sm:$0xf]
        %v569 = vld [vmem:[%s8 + $0xc] sm:$0xf]
        %v570 = vld [vmem:[%s8 + $0x10] sm:$0xf]
        %v571 = vld [vmem:[%s8 + $0x14] sm:$0xf]
        %v572 = vld [vmem:[%s8 + $0x18] sm:$0xf]
        %v573 = vld [vmem:[%s8 + $0x1c] sm:$0xf]
        %v574 = vld [vmem:[%s8 + $0x20] sm:$0xf]
        %v575 = vld [vmem:[%s8 + $0x24] sm:$0xf]
        %v576 = vld [vmem:[%s8 + $0x28] sm:$0xf]
        %v577 = vld [vmem:[%s8 + $0x2c] sm:$0xf]
        %v578 = vld [vmem:[%s8 + $0x30] sm:$0xf]
        %v579 = vld [vmem:[%s8 + $0x34] sm:$0xf]
        %v580 = vld [vmem:[%s8 + $0x38] sm:$0xf]
        %v581 = vld [vmem:[%s8 + $0x3c] sm:$0xf]
        %v582 = vld [vmem:[%s9] sm:$0x1]
        %v584 = vperm.slane %v582, 0
        %v602 = vunpack.c.l.b16 %v566
        %v603 = vunpack.c.l.b16 %v567
        %v604 = vunpack.c.l.b16 %v568
        %v605 = vunpack.c.l.b16 %v569
        %v606 = vunpack.c.l.b16 %v570
        %v607 = vunpack.c.l.b16 %v571
        %v608 = vunpack.c.l.b16 %v572
        %v609 = vunpack.c.l.b16 %v573
        %v610 = vunpack.c.l.b16 %v574
        %v611 = vunpack.c.l.b16 %v575
        %v612 = vunpack.c.l.b16 %v576
        %v613 = vunpack.c.l.b16 %v577
        %v614 = vunpack.c.l.b16 %v578
        %v615 = vunpack.c.l.b16 %v579
        %v616 = vunpack.c.l.b16 %v580
        %v617 = vunpack.c.l.b16 %v581
        %v618 = vpack.c.b16 %v603, %v602
        %v619 = vpack.c.b16 %v605, %v604
        %v620 = vpack.c.b16 %v607, %v606
        %v621 = vpack.c.b16 %v609, %v608
        %v622 = vpack.c.b16 %v611, %v610
        %v623 = vpack.c.b16 %v613, %v612
        %v624 = vpack.c.b16 %v615, %v614
        %v625 = vpack.c.b16 %v617, %v616
        %634 = vmatpush.bf16.msra.mxu0 %v625
        %635 = vmatpush.bf16.msra.mxu0 %v624
        %636 = vmatpush.bf16.msra.mxu0 %v623
        %637 = vmatpush.bf16.msra.mxu0 %v622
        %638 = vmatpush.bf16.msra.mxu0 %v621
        %639 = vmatpush.bf16.msra.mxu0 %v620
        %640 = vmatpush.bf16.msra.mxu0 %v619
        %641 = vmatpush.bf16.msra.mxu0 %v618
        %642 = vmatmul.bf16.gmra.mxu0 %v565
        %v643 = vpop.f32.mrf.mxu0
        %v644 = vadd.f32 %v584, %v643
        %v645 = vpop.f32.mrf.mxu0
        %646 = vdwg.mxu0
        %v647 = vadd.f32 %v448, %v644
        %648 = vst.msk [vmem:[%s393] sm:$0xff] %vm431, %v647
        %s649 = sand.u32 %s270, 1
        %s650 = scalar_lea.sflag [#allocation3], %s649
        %s651 = sand.u32 %s270, 1
        %s652 = smul.addr %s651, 8
        %s653 = scalar_lea.vmem [#allocation2], %s652
        // Predicated region
        $region61: #{block_forward.5} parent=59 // pred_check
          %p654 = pneg %p280
        $region62: #{block_forward.5} parent=59 // pred_check_branch
          %656 = sbr.rel (%p654) target = $region64
        $region63: #{block_forward.5} parent=59 // pred_region
          %658 = vsyncadd %s650, 0
          %s659 = sadd.s32 %s29, %s28
          %s660 = smul.addr %s659, 8
          %s661 = scalar_lea.hbm %s10, %s660
          %s663 = sshll.u32 %s653, 4
          %s664 = int_to_ptr.vmem [resolvable:$true] %s663
          %s665 = sshll.u32 %s661, 4
          %s666 = int_to_ptr.hbm [resolvable:$true] %s665
          %668 = dma.vmem_to_hbm [thread:$0]  %s664, 128, %s666, %s650
        $region64: #{block_forward.5} parent=59 // pred_fallthru
          _
      $region60: #{block_forward.5} parent=5 // pred_fallthru
        _
      %p669 = scmp.le.s32.totalorder 2, %s19
      // Predicated region
      $region65: #{block_forward.5} parent=5 // pred_check
        %p670 = pneg %p669
      $region66: #{block_forward.5} parent=5 // pred_check_branch
        %672 = sbr.rel (%p670) target = $region68
      $region67: #{block_forward.5} parent=5 // pred_region
        %s673 = ssub.s32 %s19, 2
        // Predicated region
        $region69: #{block_forward.5} parent=67 // pred_check
          %p674 = pneg %p286
        $region70: #{block_forward.5} parent=67 // pred_check_branch
          %676 = sbr.rel (%p674) target = $region72
        $region71: #{block_forward.5} parent=67 // pred_region
          %s677 = sand.u32 %s271, 1
          %s678 = scalar_lea.sflag [#allocation3], %s677
          %s679 = sand.u32 %s271, 1
          %s680 = smul.addr %s679, 8
          %s681 = scalar_lea.vmem [#allocation2], %s680
          %683 = dma.done %s678, 128
        $region72: #{block_forward.5} parent=67 // pred_fallthru
          _
      $region68: #{block_forward.5} parent=5 // pred_fallthru
        _
    $region6: #{block_forward.5} parent=1 // loop_footer
      %s23 = sadd.s32 1, %s19
    $region7: #{block_forward.5} parent=1 // loop_footer_branch
      %18 = sbr.rel target = $region3
    $region8: #{block_forward.5} parent=1 // loop_exit
      _
    %684 = vsyncpa [#allocation3], 1
    %s685 = scalar_lea.sflag [#allocation3], 1
    %686 = vsyncpa %s685, 1

</llo_original>
